<compile_context>
chip_gen: v6e
topology: v6e:2x2x1
jax: 0.10.0
libtpu: 0.0.40
codegen_flags: <defaults>
</compile_context>

<pallas_src>
import math
from functools import partial

import jax
import jax.numpy as jnp
from jax.experimental import pallas as pl
from jax.experimental.pallas import tpu as pltpu

FEAT_COMP_DIM = 102
FEAT_LOC_DIM = 23
EMB_DIM = 64        # emb_feat_comp_dim
REGION_DIM = 64     # feat_region_dim
CLF_HID = 64
FP = 128            # padded feature / lane width


def _round_up(x, m):
    return (x + m - 1) // m * m


def _pad_to(x, shape):
    return jnp.pad(x, [(0, s - d) for d, s in zip(x.shape, shape)])


def _leaky(x, slope=0.01):
    return jnp.where(x > 0, x, slope * x)


# ----------------------------------------------------------------------------
# Kernel
# ----------------------------------------------------------------------------
def _region_model_kernel(K, bt,
                         feat_k_ref, wide_ref,
                         w1_ref, b1_ref, w2_ref, b2_ref, w3_ref, b3_ref,
                         wreg_ref, breg_ref, wdeep_ref, bdeep_ref,
                         wdec_ref, bdec_ref,
                         wclfw_ref, wclfr_ref, bclf_ref, wc2_ref, bc2_ref,
                         region_org_ref, region_deep_ref, loc_pred_ref, cls_ref):
    bf16 = jnp.bfloat16

    def mm(a, w_ref):
        # bf16 MXU matmul, f32 accumulation.
        return jnp.dot(a.astype(bf16), w_ref[...], preferred_element_type=jnp.float32)

    # ---- netEmb on all K companies of the tile, fused into one (K*bt) chain ----
    xk = feat_k_ref[...].reshape(K * bt, FP)            # f32, aligned merge (bt % 8 == 0)
    ssq = jnp.sum(xk * xk, axis=-1, keepdims=True)
    # torch F.normalize(p=2, eps=1e-12): x / max(||x||, eps) == x * rsqrt(max(ssq, eps^2))
    inv = jax.lax.rsqrt(jnp.maximum(ssq, 1e-24))        # EUP rsqrt (free slot)
    xk = xk * inv

    h = _leaky(mm(xk, w1_ref) + b1_ref[...])            # [K*bt, 256]
    h = _leaky(mm(h, w2_ref) + b2_ref[...])             # [K*bt, 128]
    emb_k = _leaky(mm(h, w3_ref) + b3_ref[...])         # [K*bt, 64]

    # ---- netReg 'maxpooling': Conv1d(1,64,k=64) == Linear(64->64), LReLU, max over K ----
    z = _leaky(mm(emb_k, wreg_ref) + breg_ref[...])     # [K*bt, 128]  (cols >= 64 are exactly 0)
    region = z[0:bt, :]
    for k in range(1, K):                               # static unroll: pure VPU max, no relayout
        region = jnp.maximum(region, z[k * bt:(k + 1) * bt, :])
    region_org_ref[...] = region                        # lane-dense [bt, 128] store

    # ---- netDecoder: Linear(64->23) (columns zero-padded to 128) ----
    loc_pred_ref[...] = mm(region, wdec_ref) + bdec_ref[...]

    # ---- netDeep: Linear(64->64)+LeakyReLU (padded to 128) ----
    deep = _leaky(mm(region, wdeep_ref) + bdeep_ref[...])
    region_deep_ref[...] = deep

    # ---- netClf on concat([feat_comp, feat_loc, region_deep]) -- split weights, no concat ----
    # TODO(synk): nn.Dropout(p=0.1) is identity at inference; training-mode dropout not implemented.
    hcl = _leaky(mm(wide_ref[...], wclfw_ref) + mm(deep, wclfr_ref) + bclf_ref[...])
    cls_ref[...] = mm(hcl, wc2_ref) + bc2_ref[...]      # [bt, 128], cols >= 2 are 0


# ----------------------------------------------------------------------------
# Parameters
# ----------------------------------------------------------------------------
PARAM_ORDER = ['w1', 'b1', 'w2', 'b2', 'w3', 'b3',
               'wreg', 'breg', 'wdeep', 'bdeep', 'wdec', 'bdec',
               'wclf_w', 'wclf_r', 'bclf', 'wc2', 'bc2']


def init_params(key):
    """Deterministic synthetic parameters (PyTorch-Linear-style uniform init)."""
    def lin(k, fin, fout):
        kw, kb = jax.random.split(k)
        bound = 1.0 / math.sqrt(fin)
        w = jax.random.uniform(kw, (fin, fout), jnp.float32, -bound, bound)
        b = jax.random.uniform(kb, (1, fout), jnp.float32, -bound, bound)
        return w, b

    ks = jax.random.split(key, 8)
    p = {}
    p['w1'], p['b1'] = lin(ks[0], FEAT_COMP_DIM, 256)
    p['w2'], p['b2'] = lin(ks[1], 256, 128)
    p['w3'], p['b3'] = lin(ks[2], 128, EMB_DIM)
    # Conv1d(in=1, out=64, kernel=64) folded to an equivalent Linear(64 -> 64).
    p['wreg'], p['breg'] = lin(ks[3], EMB_DIM, REGION_DIM)
    p['wdeep'], p['bdeep'] = lin(ks[4], REGION_DIM, REGION_DIM)
    p['wdec'], p['bdec'] = lin(ks[5], REGION_DIM, FEAT_LOC_DIM)
    p['wclf1'], p['bclf1'] = lin(ks[6], FEAT_COMP_DIM + FEAT_LOC_DIM + REGION_DIM, CLF_HID)
    p['wc2'], p['bc2'] = lin(ks[7], CLF_HID, 2)
    return p


def _prepare_kernel_params(params):
    """Pad to lane multiples (zeros -> numerically exact) and cast weights to bf16."""
    bf = jnp.bfloat16
    kp = {}
    kp['w1'] = _pad_to(params['w1'], (FP, 256)).astype(bf)            # 102 -> 128 input rows
    kp['b1'] = params['b1']
    kp['w2'] = params['w2'].astype(bf)
    kp['b2'] = params['b2']
    kp['w3'] = params['w3'].astype(bf)
    kp['b3'] = params['b3']
    kp['wreg'] = _pad_to(params['wreg'], (EMB_DIM, FP)).astype(bf)    # out cols 64 -> 128
    kp['breg'] = _pad_to(params['breg'], (1, FP))
    kp['wdeep'] = _pad_to(params['wdeep'], (FP, FP)).astype(bf)
    kp['bdeep'] = _pad_to(params['bdeep'], (1, FP))
    kp['wdec'] = _pad_to(params['wdec'], (FP, FP)).astype(bf)
    kp['bdec'] = _pad_to(params['bdec'], (1, FP))
    wide_rows = FEAT_COMP_DIM + FEAT_LOC_DIM                          # 125
    kp['wclf_w'] = _pad_to(params['wclf1'][:wide_rows], (FP, CLF_HID)).astype(bf)
    kp['wclf_r'] = _pad_to(params['wclf1'][wide_rows:], (FP, CLF_HID)).astype(bf)
    kp['bclf'] = params['bclf1']
    kp['wc2'] = _pad_to(params['wc2'], (CLF_HID, FP)).astype(bf)      # out cols 2 -> 128
    kp['bc2'] = _pad_to(params['bc2'], (1, FP))
    return kp


# ----------------------------------------------------------------------------
# Wrapper
# ----------------------------------------------------------------------------
def region_model_forward(params, feat_comp, feat_K_comp, feat_loc, *, block_b=None):
    B, K, F = feat_K_comp.shape
    assert F == FEAT_COMP_DIM

    # Batch tile: multiple of 8 (sublane), capped so VMEM stays small with 2x buffering.
    bt = block_b or min(256, _round_up(max(B, 1), 8))
    B_pad = _round_up(B, bt)

    # Inputs. feat_K kept f32 (exact l2-norm); laid out [K, B_pad, 128] so the
    # per-tile kernel sees K contiguous, sublane-aligned row groups.
    wide = jnp.concatenate([feat_comp, feat_loc], axis=1)                  # [B, 125]
    wide = _pad_to(wide.astype(jnp.float32), (B_pad, FP))                  # [B_pad, 128]
    feat_k = _pad_to(feat_K_comp.astype(jnp.float32), (B_pad, K, FP))
    feat_k = jnp.transpose(feat_k, (1, 0, 2))                              # [K, B_pad, 128]

    kp = _prepare_kernel_params(params)
    args = [feat_k, wide] + [kp[n] for n in PARAM_ORDER]

    def const_spec(a):
        return pl.BlockSpec(a.shape, lambda i, nd=a.ndim: (0,) * nd)       # resident weights

    in_specs = ([pl.BlockSpec((K, bt, FP), lambda i: (0, i, 0)),
                 pl.BlockSpec((bt, FP), lambda i: (i, 0))]
                + [const_spec(kp[n]) for n in PARAM_ORDER])
    out_spec = pl.BlockSpec((bt, FP), lambda i: (i, 0))
    out_shape = tuple(jax.ShapeDtypeStruct((B_pad, FP), jnp.float32) for _ in range(4))

    flops = (2 * B_pad * K * (FP * 256 + 256 * 128 + 128 * EMB_DIM + EMB_DIM * FP)
             + 2 * B_pad * (FP * FP * 2 + FP * CLF_HID * 2 + CLF_HID * FP))
    bytes_accessed = (sum(int(a.size) * a.dtype.itemsize for a in args)
                      + 4 * B_pad * FP * 4)
    cost = pl.CostEstimate(flops=flops, transcendentals=B_pad * K,
                           bytes_accessed=bytes_accessed)

    region_org, region_deep, loc_pred, cls = pl.pallas_call(
        partial(_region_model_kernel, K, bt),
        grid=(B_pad // bt,),
        in_specs=in_specs,
        out_specs=(out_spec, out_spec, out_spec, out_spec),
        out_shape=out_shape,
        compiler_params=pltpu.CompilerParams(dimension_semantics=("parallel",)),
        cost_estimate=cost,
    )(*args)

    return {'feat_region_org': region_org[:B, :REGION_DIM],
            'feat_region_deep': region_deep[:B, :REGION_DIM],
            'feat_loc_pred': loc_pred[:B, :FEAT_LOC_DIM],
            'outputs': cls[:B, :2]}


# ----------------------------------------------------------------------------
# Pure-JAX reference (mirrors the PyTorch forward, f32 HIGHEST precision)
# ----------------------------------------------------------------------------
def reference_forward(params, feat_comp, feat_K_comp, feat_loc):
    hp = jax.lax.Precision.HIGHEST
    dot = lambda a, b: jnp.dot(a, b, precision=hp)

    def l2n(x, eps=1e-12):
        n = jnp.sqrt(jnp.sum(x * x, axis=-1, keepdims=True))
        return x / jnp.maximum(n, eps)

    def net_emb(x):
        x = l2n(x)
        h = _leaky(dot(x, params['w1']) + params['b1'])
        h = _leaky(dot(h, params['w2']) + params['b2'])
        return _leaky(dot(h, params['w3']) + params['b3'])

    emb_k = net_emb(feat_K_comp)                                         # [B,K,64]
    z = _leaky(dot(emb_k, params['wreg']) + params['breg'])              # [B,K,64]
    region_org = jnp.max(z, axis=1)                                      # [B,64]
    loc_pred = dot(region_org, params['wdec']) + params['bdec']          # [B,23]
    region_deep = _leaky(dot(region_org, params['wdeep']) + params['bdeep'])
    cat = jnp.concatenate([feat_comp, feat_loc, region_deep], axis=1)    # [B,189]
    h = _leaky(dot(cat, params['wclf1']) + params['bclf1'])              # Dropout == identity (eval)
    out = dot(h, params['wc2']) + params['bc2']
    return {'feat_region_org': region_org, 'feat_region_deep': region_deep,
            'feat_loc_pred': loc_pred, 'outputs': out}


if __name__ == "__main__":
    key = jax.random.PRNGKey(0)
    kparam, kx, kk, kl = jax.random.split(key, 4)

    B, K = 2, 8
    params = init_params(kparam)
    feat_comp = jax.random.normal(kx, (B, FEAT_COMP_DIM), jnp.float32)
    feat_K_comp = jax.random.normal(kk, (B, K, FEAT_COMP_DIM), jnp.float32)
    feat_loc = jax.random.normal(kl, (B, FEAT_LOC_DIM), jnp.float32)

    out = region_model_forward(params, feat_comp, feat_K_comp, feat_loc)
    out = jax.block_until_ready(out)

    assert out['feat_region_org'].shape == (B, REGION_DIM)
    assert out['feat_region_deep'].shape == (B, REGION_DIM)
    assert out['feat_loc_pred'].shape == (B, FEAT_LOC_DIM)
    assert out['outputs'].shape == (B, 2)

    ref = reference_forward(params, feat_comp, feat_K_comp, feat_loc)
    for name in ('feat_region_org', 'feat_region_deep', 'feat_loc_pred', 'outputs'):
        err = float(jnp.max(jnp.abs(out[name] - ref[name])))
        assert jnp.allclose(out[name], ref[name], atol=2e-2, rtol=2e-2), (name, err)

    print("KERNEL_OK")
</pallas_src>

<mosaic_0001>
module attributes {stable_mosaic.version = 11 : i64} {
  func.func @_region_model_kernel(%arg0: i32, %arg1: memref<8x8x128xf32, #tpu.memory_space<vmem>>, %arg2: memref<8x128xf32, #tpu.memory_space<vmem>>, %arg3: memref<128x256xbf16, #tpu.memory_space<vmem>>, %arg4: memref<1x256xf32, #tpu.memory_space<vmem>>, %arg5: memref<256x128xbf16, #tpu.memory_space<vmem>>, %arg6: memref<1x128xf32, #tpu.memory_space<vmem>>, %arg7: memref<128x64xbf16, #tpu.memory_space<vmem>>, %arg8: memref<1x64xf32, #tpu.memory_space<vmem>>, %arg9: memref<64x128xbf16, #tpu.memory_space<vmem>>, %arg10: memref<1x128xf32, #tpu.memory_space<vmem>>, %arg11: memref<128x128xbf16, #tpu.memory_space<vmem>>, %arg12: memref<1x128xf32, #tpu.memory_space<vmem>>, %arg13: memref<128x128xbf16, #tpu.memory_space<vmem>>, %arg14: memref<1x128xf32, #tpu.memory_space<vmem>>, %arg15: memref<128x64xbf16, #tpu.memory_space<vmem>>, %arg16: memref<128x64xbf16, #tpu.memory_space<vmem>>, %arg17: memref<1x64xf32, #tpu.memory_space<vmem>>, %arg18: memref<64x128xbf16, #tpu.memory_space<vmem>>, %arg19: memref<1x128xf32, #tpu.memory_space<vmem>>, %arg20: memref<8x128xf32, #tpu.memory_space<vmem>>, %arg21: memref<8x128xf32, #tpu.memory_space<vmem>>, %arg22: memref<8x128xf32, #tpu.memory_space<vmem>>, %arg23: memref<8x128xf32, #tpu.memory_space<vmem>>) attributes {dimension_semantics = [#tpu.dimension_semantics<parallel>], iteration_bounds = array<i64: 1>, scalar_prefetch = 0 : i64, scratch_operands = 0 : i64, tpu.core_type = #tpu.core_type<tc>, window_params = [{transform_indices = @transform_0, window_bounds = array<i64: 8, 8, 128>}, {transform_indices = @transform_1, window_bounds = array<i64: 8, 128>}, {pipeline_mode = #tpu.pipeline_mode<synchronous>, transform_indices = @transform_2, window_bounds = array<i64: 128, 256>}, {pipeline_mode = #tpu.pipeline_mode<synchronous>, transform_indices = @transform_3, window_bounds = array<i64: 1, 256>}, {pipeline_mode = #tpu.pipeline_mode<synchronous>, transform_indices = @transform_4, window_bounds = array<i64: 256, 128>}, {pipeline_mode = #tpu.pipeline_mode<synchronous>, transform_indices = @transform_5, window_bounds = array<i64: 1, 128>}, {pipeline_mode = #tpu.pipeline_mode<synchronous>, transform_indices = @transform_6, window_bounds = array<i64: 128, 64>}, {pipeline_mode = #tpu.pipeline_mode<synchronous>, transform_indices = @transform_7, window_bounds = array<i64: 1, 64>}, {pipeline_mode = #tpu.pipeline_mode<synchronous>, transform_indices = @transform_8, window_bounds = array<i64: 64, 128>}, {pipeline_mode = #tpu.pipeline_mode<synchronous>, transform_indices = @transform_9, window_bounds = array<i64: 1, 128>}, {pipeline_mode = #tpu.pipeline_mode<synchronous>, transform_indices = @transform_10, window_bounds = array<i64: 128, 128>}, {pipeline_mode = #tpu.pipeline_mode<synchronous>, transform_indices = @transform_11, window_bounds = array<i64: 1, 128>}, {pipeline_mode = #tpu.pipeline_mode<synchronous>, transform_indices = @transform_12, window_bounds = array<i64: 128, 128>}, {pipeline_mode = #tpu.pipeline_mode<synchronous>, transform_indices = @transform_13, window_bounds = array<i64: 1, 128>}, {pipeline_mode = #tpu.pipeline_mode<synchronous>, transform_indices = @transform_14, window_bounds = array<i64: 128, 64>}, {pipeline_mode = #tpu.pipeline_mode<synchronous>, transform_indices = @transform_15, window_bounds = array<i64: 128, 64>}, {pipeline_mode = #tpu.pipeline_mode<synchronous>, transform_indices = @transform_16, window_bounds = array<i64: 1, 64>}, {pipeline_mode = #tpu.pipeline_mode<synchronous>, transform_indices = @transform_17, window_bounds = array<i64: 64, 128>}, {pipeline_mode = #tpu.pipeline_mode<synchronous>, transform_indices = @transform_18, window_bounds = array<i64: 1, 128>}, {transform_indices = @transform_19, window_bounds = array<i64: 8, 128>}, {transform_indices = @transform_20, window_bounds = array<i64: 8, 128>}, {transform_indices = @transform_21, window_bounds = array<i64: 8, 128>}, {transform_indices = @transform_22, window_bounds = array<i64: 8, 128>}]} {
    %c0 = arith.constant 0 : index
    %c0_0 = arith.constant 0 : index
    %c0_1 = arith.constant 0 : index
    %0 = vector.load %arg1[%c0, %c0_0, %c0_1] : memref<8x8x128xf32, #tpu.memory_space<vmem>>, vector<8x8x128xf32>
    %1 = vector.shape_cast %0 : vector<8x8x128xf32> to vector<64x128xf32>
    %2 = arith.mulf %1, %1 : vector<64x128xf32>
    %cst = arith.constant dense<0.000000e+00> : vector<64xf32>
    %3 = vector.multi_reduction <add>, %2, %cst [1] : vector<64x128xf32> to vector<64xf32>
    %4 = vector.shape_cast %3 : vector<64xf32> to vector<64x1xf32>
    %cst_2 = arith.constant 1.000000e-24 : f32
    %5 = vector.broadcast %cst_2 : f32 to vector<64x1xf32>
    %6 = arith.maximumf %4, %5 : vector<64x1xf32>
    %7 = math.rsqrt %6 : vector<64x1xf32>
    %8 = vector.broadcast %7 : vector<64x1xf32> to vector<64x128xf32>
    %9 = arith.mulf %1, %8 : vector<64x128xf32>
    %10 = arith.truncf %9 : vector<64x128xf32> to vector<64x128xbf16>
    %c0_3 = arith.constant 0 : index
    %c0_4 = arith.constant 0 : index
    %11 = vector.load %arg3[%c0_3, %c0_4] : memref<128x256xbf16, #tpu.memory_space<vmem>>, vector<128x256xbf16>
    %cst_5 = arith.constant dense<0.000000e+00> : vector<64x256xf32>
    %12 = tpu.matmul %10, %11, %cst_5 {dimension_numbers = #tpu.dot_dimension_numbers<[1], [0], [0], [1], [0, 0, 1, 1], [], []>} : vector<64x128xbf16>, vector<128x256xbf16>, vector<64x256xf32> -> vector<64x256xf32>
    %c0_6 = arith.constant 0 : index
    %c0_7 = arith.constant 0 : index
    %13 = vector.load %arg4[%c0_6, %c0_7] : memref<1x256xf32, #tpu.memory_space<vmem>>, vector<1x256xf32>
    %14 = vector.broadcast %13 : vector<1x256xf32> to vector<64x256xf32>
    %15 = arith.addf %12, %14 : vector<64x256xf32>
    %cst_8 = arith.constant 0.000000e+00 : f32
    %16 = vector.broadcast %cst_8 : f32 to vector<64x256xf32>
    %17 = arith.cmpf ogt, %15, %16 : vector<64x256xf32>
    %cst_9 = arith.constant 0.00999999977 : f32
    %18 = vector.broadcast %cst_9 : f32 to vector<64x256xf32>
    %19 = arith.mulf %18, %15 : vector<64x256xf32>
    %20 = arith.select %17, %15, %19 : vector<64x256xi1>, vector<64x256xf32>
    %21 = arith.truncf %20 : vector<64x256xf32> to vector<64x256xbf16>
    %c0_10 = arith.constant 0 : index
    %c0_11 = arith.constant 0 : index
    %22 = vector.load %arg5[%c0_10, %c0_11] : memref<256x128xbf16, #tpu.memory_space<vmem>>, vector<256x128xbf16>
    %cst_12 = arith.constant dense<0.000000e+00> : vector<64x128xf32>
    %23 = tpu.matmul %21, %22, %cst_12 {dimension_numbers = #tpu.dot_dimension_numbers<[1], [0], [0], [1], [0, 0, 1, 1], [], []>} : vector<64x256xbf16>, vector<256x128xbf16>, vector<64x128xf32> -> vector<64x128xf32>
    %c0_13 = arith.constant 0 : index
    %c0_14 = arith.constant 0 : index
    %24 = vector.load %arg6[%c0_13, %c0_14] : memref<1x128xf32, #tpu.memory_space<vmem>>, vector<1x128xf32>
    %25 = vector.broadcast %24 : vector<1x128xf32> to vector<64x128xf32>
    %26 = arith.addf %23, %25 : vector<64x128xf32>
    %cst_15 = arith.constant 0.000000e+00 : f32
    %27 = vector.broadcast %cst_15 : f32 to vector<64x128xf32>
    %28 = arith.cmpf ogt, %26, %27 : vector<64x128xf32>
    %cst_16 = arith.constant 0.00999999977 : f32
    %29 = vector.broadcast %cst_16 : f32 to vector<64x128xf32>
    %30 = arith.mulf %29, %26 : vector<64x128xf32>
    %31 = arith.select %28, %26, %30 : vector<64x128xi1>, vector<64x128xf32>
    %32 = arith.truncf %31 : vector<64x128xf32> to vector<64x128xbf16>
    %c0_17 = arith.constant 0 : index
    %c0_18 = arith.constant 0 : index
    %33 = vector.load %arg7[%c0_17, %c0_18] : memref<128x64xbf16, #tpu.memory_space<vmem>>, vector<128x64xbf16>
    %cst_19 = arith.constant dense<0.000000e+00> : vector<64x64xf32>
    %34 = tpu.matmul %32, %33, %cst_19 {dimension_numbers = #tpu.dot_dimension_numbers<[1], [0], [0], [1], [0, 0, 1, 1], [], []>} : vector<64x128xbf16>, vector<128x64xbf16>, vector<64x64xf32> -> vector<64x64xf32>
    %c0_20 = arith.constant 0 : index
    %c0_21 = arith.constant 0 : index
    %35 = vector.load %arg8[%c0_20, %c0_21] : memref<1x64xf32, #tpu.memory_space<vmem>>, vector<1x64xf32>
    %36 = vector.broadcast %35 : vector<1x64xf32> to vector<64x64xf32>
    %37 = arith.addf %34, %36 : vector<64x64xf32>
    %cst_22 = arith.constant 0.000000e+00 : f32
    %38 = vector.broadcast %cst_22 : f32 to vector<64x64xf32>
    %39 = arith.cmpf ogt, %37, %38 : vector<64x64xf32>
    %cst_23 = arith.constant 0.00999999977 : f32
    %40 = vector.broadcast %cst_23 : f32 to vector<64x64xf32>
    %41 = arith.mulf %40, %37 : vector<64x64xf32>
    %42 = arith.select %39, %37, %41 : vector<64x64xi1>, vector<64x64xf32>
    %43 = arith.truncf %42 : vector<64x64xf32> to vector<64x64xbf16>
    %c0_24 = arith.constant 0 : index
    %c0_25 = arith.constant 0 : index
    %44 = vector.load %arg9[%c0_24, %c0_25] : memref<64x128xbf16, #tpu.memory_space<vmem>>, vector<64x128xbf16>
    %cst_26 = arith.constant dense<0.000000e+00> : vector<64x128xf32>
    %45 = tpu.matmul %43, %44, %cst_26 {dimension_numbers = #tpu.dot_dimension_numbers<[1], [0], [0], [1], [0, 0, 1, 1], [], []>} : vector<64x64xbf16>, vector<64x128xbf16>, vector<64x128xf32> -> vector<64x128xf32>
    %c0_27 = arith.constant 0 : index
    %c0_28 = arith.constant 0 : index
    %46 = vector.load %arg10[%c0_27, %c0_28] : memref<1x128xf32, #tpu.memory_space<vmem>>, vector<1x128xf32>
    %47 = vector.broadcast %46 : vector<1x128xf32> to vector<64x128xf32>
    %48 = arith.addf %45, %47 : vector<64x128xf32>
    %cst_29 = arith.constant 0.000000e+00 : f32
    %49 = vector.broadcast %cst_29 : f32 to vector<64x128xf32>
    %50 = arith.cmpf ogt, %48, %49 : vector<64x128xf32>
    %cst_30 = arith.constant 0.00999999977 : f32
    %51 = vector.broadcast %cst_30 : f32 to vector<64x128xf32>
    %52 = arith.mulf %51, %48 : vector<64x128xf32>
    %53 = arith.select %50, %48, %52 : vector<64x128xi1>, vector<64x128xf32>
    %54 = vector.extract_strided_slice %53 {offsets = [0, 0], sizes = [8, 128], strides = [1, 1]} : vector<64x128xf32> to vector<8x128xf32>
    %55 = vector.extract_strided_slice %53 {offsets = [8, 0], sizes = [8, 128], strides = [1, 1]} : vector<64x128xf32> to vector<8x128xf32>
    %56 = arith.maximumf %54, %55 : vector<8x128xf32>
    %57 = vector.extract_strided_slice %53 {offsets = [16, 0], sizes = [8, 128], strides = [1, 1]} : vector<64x128xf32> to vector<8x128xf32>
    %58 = arith.maximumf %56, %57 : vector<8x128xf32>
    %59 = vector.extract_strided_slice %53 {offsets = [24, 0], sizes = [8, 128], strides = [1, 1]} : vector<64x128xf32> to vector<8x128xf32>
    %60 = arith.maximumf %58, %59 : vector<8x128xf32>
    %61 = vector.extract_strided_slice %53 {offsets = [32, 0], sizes = [8, 128], strides = [1, 1]} : vector<64x128xf32> to vector<8x128xf32>
    %62 = arith.maximumf %60, %61 : vector<8x128xf32>
    %63 = vector.extract_strided_slice %53 {offsets = [40, 0], sizes = [8, 128], strides = [1, 1]} : vector<64x128xf32> to vector<8x128xf32>
    %64 = arith.maximumf %62, %63 : vector<8x128xf32>
    %65 = vector.extract_strided_slice %53 {offsets = [48, 0], sizes = [8, 128], strides = [1, 1]} : vector<64x128xf32> to vector<8x128xf32>
    %66 = arith.maximumf %64, %65 : vector<8x128xf32>
    %67 = vector.extract_strided_slice %53 {offsets = [56, 0], sizes = [8, 128], strides = [1, 1]} : vector<64x128xf32> to vector<8x128xf32>
    %68 = arith.maximumf %66, %67 : vector<8x128xf32>
    %c0_31 = arith.constant 0 : index
    %c0_32 = arith.constant 0 : index
    %69 = vector.load %arg20[%c0_31, %c0_32] : memref<8x128xf32, #tpu.memory_space<vmem>>, vector<8x128xf32>
    tpu.vector_store %arg20[%c0_31, %c0_32], %68 {strides = array<i32>} : memref<8x128xf32, #tpu.memory_space<vmem>>, vector<8x128xf32>,
    %70 = arith.truncf %68 : vector<8x128xf32> to vector<8x128xbf16>
    %c0_33 = arith.constant 0 : index
    %c0_34 = arith.constant 0 : index
    %71 = vector.load %arg13[%c0_33, %c0_34] : memref<128x128xbf16, #tpu.memory_space<vmem>>, vector<128x128xbf16>
    %cst_35 = arith.constant dense<0.000000e+00> : vector<8x128xf32>
    %72 = tpu.matmul %70, %71, %cst_35 {dimension_numbers = #tpu.dot_dimension_numbers<[1], [0], [0], [1], [0, 0, 1, 1], [], []>} : vector<8x128xbf16>, vector<128x128xbf16>, vector<8x128xf32> -> vector<8x128xf32>
    %c0_36 = arith.constant 0 : index
    %c0_37 = arith.constant 0 : index
    %73 = vector.load %arg14[%c0_36, %c0_37] : memref<1x128xf32, #tpu.memory_space<vmem>>, vector<1x128xf32>
    %74 = vector.broadcast %73 : vector<1x128xf32> to vector<8x128xf32>
    %75 = arith.addf %72, %74 : vector<8x128xf32>
    %c0_38 = arith.constant 0 : index
    %c0_39 = arith.constant 0 : index
    %76 = vector.load %arg22[%c0_38, %c0_39] : memref<8x128xf32, #tpu.memory_space<vmem>>, vector<8x128xf32>
    tpu.vector_store %arg22[%c0_38, %c0_39], %75 {strides = array<i32>} : memref<8x128xf32, #tpu.memory_space<vmem>>, vector<8x128xf32>,
    %77 = arith.truncf %68 : vector<8x128xf32> to vector<8x128xbf16>
    %c0_40 = arith.constant 0 : index
    %c0_41 = arith.constant 0 : index
    %78 = vector.load %arg11[%c0_40, %c0_41] : memref<128x128xbf16, #tpu.memory_space<vmem>>, vector<128x128xbf16>
    %cst_42 = arith.constant dense<0.000000e+00> : vector<8x128xf32>
    %79 = tpu.matmul %77, %78, %cst_42 {dimension_numbers = #tpu.dot_dimension_numbers<[1], [0], [0], [1], [0, 0, 1, 1], [], []>} : vector<8x128xbf16>, vector<128x128xbf16>, vector<8x128xf32> -> vector<8x128xf32>
    %c0_43 = arith.constant 0 : index
    %c0_44 = arith.constant 0 : index
    %80 = vector.load %arg12[%c0_43, %c0_44] : memref<1x128xf32, #tpu.memory_space<vmem>>, vector<1x128xf32>
    %81 = vector.broadcast %80 : vector<1x128xf32> to vector<8x128xf32>
    %82 = arith.addf %79, %81 : vector<8x128xf32>
    %cst_45 = arith.constant 0.000000e+00 : f32
    %83 = vector.broadcast %cst_45 : f32 to vector<8x128xf32>
    %84 = arith.cmpf ogt, %82, %83 : vector<8x128xf32>
    %cst_46 = arith.constant 0.00999999977 : f32
    %85 = vector.broadcast %cst_46 : f32 to vector<8x128xf32>
    %86 = arith.mulf %85, %82 : vector<8x128xf32>
    %87 = arith.select %84, %82, %86 : vector<8x128xi1>, vector<8x128xf32>
    %c0_47 = arith.constant 0 : index
    %c0_48 = arith.constant 0 : index
    %88 = vector.load %arg21[%c0_47, %c0_48] : memref<8x128xf32, #tpu.memory_space<vmem>>, vector<8x128xf32>
    tpu.vector_store %arg21[%c0_47, %c0_48], %87 {strides = array<i32>} : memref<8x128xf32, #tpu.memory_space<vmem>>, vector<8x128xf32>,
    %c0_49 = arith.constant 0 : index
    %c0_50 = arith.constant 0 : index
    %89 = vector.load %arg2[%c0_49, %c0_50] : memref<8x128xf32, #tpu.memory_space<vmem>>, vector<8x128xf32>
    %90 = arith.truncf %89 : vector<8x128xf32> to vector<8x128xbf16>
    %c0_51 = arith.constant 0 : index
    %c0_52 = arith.constant 0 : index
    %91 = vector.load %arg15[%c0_51, %c0_52] : memref<128x64xbf16, #tpu.memory_space<vmem>>, vector<128x64xbf16>
    %cst_53 = arith.constant dense<0.000000e+00> : vector<8x64xf32>
    %92 = tpu.matmul %90, %91, %cst_53 {dimension_numbers = #tpu.dot_dimension_numbers<[1], [0], [0], [1], [0, 0, 1, 1], [], []>} : vector<8x128xbf16>, vector<128x64xbf16>, vector<8x64xf32> -> vector<8x64xf32>
    %93 = arith.truncf %87 : vector<8x128xf32> to vector<8x128xbf16>
    %c0_54 = arith.constant 0 : index
    %c0_55 = arith.constant 0 : index
    %94 = vector.load %arg16[%c0_54, %c0_55] : memref<128x64xbf16, #tpu.memory_space<vmem>>, vector<128x64xbf16>
    %cst_56 = arith.constant dense<0.000000e+00> : vector<8x64xf32>
    %95 = tpu.matmul %93, %94, %cst_56 {dimension_numbers = #tpu.dot_dimension_numbers<[1], [0], [0], [1], [0, 0, 1, 1], [], []>} : vector<8x128xbf16>, vector<128x64xbf16>, vector<8x64xf32> -> vector<8x64xf32>
    %96 = arith.addf %92, %95 : vector<8x64xf32>
    %c0_57 = arith.constant 0 : index
    %c0_58 = arith.constant 0 : index
    %97 = vector.load %arg17[%c0_57, %c0_58] : memref<1x64xf32, #tpu.memory_space<vmem>>, vector<1x64xf32>
    %98 = vector.broadcast %97 : vector<1x64xf32> to vector<8x64xf32>
    %99 = arith.addf %96, %98 : vector<8x64xf32>
    %cst_59 = arith.constant 0.000000e+00 : f32
    %100 = vector.broadcast %cst_59 : f32 to vector<8x64xf32>
    %101 = arith.cmpf ogt, %99, %100 : vector<8x64xf32>
    %cst_60 = arith.constant 0.00999999977 : f32
    %102 = vector.broadcast %cst_60 : f32 to vector<8x64xf32>
    %103 = arith.mulf %102, %99 : vector<8x64xf32>
    %104 = arith.select %101, %99, %103 : vector<8x64xi1>, vector<8x64xf32>
    %105 = arith.truncf %104 : vector<8x64xf32> to vector<8x64xbf16>
    %c0_61 = arith.constant 0 : index
    %c0_62 = arith.constant 0 : index
    %106 = vector.load %arg18[%c0_61, %c0_62] : memref<64x128xbf16, #tpu.memory_space<vmem>>, vector<64x128xbf16>
    %cst_63 = arith.constant dense<0.000000e+00> : vector<8x128xf32>
    %107 = tpu.matmul %105, %106, %cst_63 {dimension_numbers = #tpu.dot_dimension_numbers<[1], [0], [0], [1], [0, 0, 1, 1], [], []>} : vector<8x64xbf16>, vector<64x128xbf16>, vector<8x128xf32> -> vector<8x128xf32>
    %c0_64 = arith.constant 0 : index
    %c0_65 = arith.constant 0 : index
    %108 = vector.load %arg19[%c0_64, %c0_65] : memref<1x128xf32, #tpu.memory_space<vmem>>, vector<1x128xf32>
    %109 = vector.broadcast %108 : vector<1x128xf32> to vector<8x128xf32>
    %110 = arith.addf %107, %109 : vector<8x128xf32>
    %c0_66 = arith.constant 0 : index
    %c0_67 = arith.constant 0 : index
    %111 = vector.load %arg23[%c0_66, %c0_67] : memref<8x128xf32, #tpu.memory_space<vmem>>, vector<8x128xf32>
    tpu.vector_store %arg23[%c0_66, %c0_67], %110 {strides = array<i32>} : memref<8x128xf32, #tpu.memory_space<vmem>>, vector<8x128xf32>,
    return
  }
  func.func @transform_0(%arg0: i32) -> (i32, i32, i32) {
    %c0_i32 = arith.constant 0 : i32
    %c0_i32_0 = arith.constant 0 : i32
    %c0_i32_1 = arith.constant 0 : i32
    return %c0_i32, %arg0, %c0_i32_0 : i32, i32, i32
  }
  func.func @transform_1(%arg0: i32) -> (i32, i32) {
    %c0_i32 = arith.constant 0 : i32
    %c0_i32_0 = arith.constant 0 : i32
    return %arg0, %c0_i32 : i32, i32
  }
  func.func @transform_2(%arg0: i32) -> (i32, i32) {
    %c0_i32 = arith.constant 0 : i32
    %c0_i32_0 = arith.constant 0 : i32
    %c0_i32_1 = arith.constant 0 : i32
    return %c0_i32, %c0_i32_0 : i32, i32
  }
  func.func @transform_3(%arg0: i32) -> (i32, i32) {
    %c0_i32 = arith.constant 0 : i32
    %c0_i32_0 = arith.constant 0 : i32
    %c0_i32_1 = arith.constant 0 : i32
    return %c0_i32, %c0_i32_0 : i32, i32
  }
  func.func @transform_4(%arg0: i32) -> (i32, i32) {
    %c0_i32 = arith.constant 0 : i32
    %c0_i32_0 = arith.constant 0 : i32
    %c0_i32_1 = arith.constant 0 : i32
    return %c0_i32, %c0_i32_0 : i32, i32
  }
  func.func @transform_5(%arg0: i32) -> (i32, i32) {
    %c0_i32 = arith.constant 0 : i32
    %c0_i32_0 = arith.constant 0 : i32
    %c0_i32_1 = arith.constant 0 : i32
    return %c0_i32, %c0_i32_0 : i32, i32
  }
  func.func @transform_6(%arg0: i32) -> (i32, i32) {
    %c0_i32 = arith.constant 0 : i32
    %c0_i32_0 = arith.constant 0 : i32
    %c0_i32_1 = arith.constant 0 : i32
    return %c0_i32, %c0_i32_0 : i32, i32
  }
  func.func @transform_7(%arg0: i32) -> (i32, i32) {
    %c0_i32 = arith.constant 0 : i32
    %c0_i32_0 = arith.constant 0 : i32
    %c0_i32_1 = arith.constant 0 : i32
    return %c0_i32, %c0_i32_0 : i32, i32
  }
  func.func @transform_8(%arg0: i32) -> (i32, i32) {
    %c0_i32 = arith.constant 0 : i32
    %c0_i32_0 = arith.constant 0 : i32
    %c0_i32_1 = arith.constant 0 : i32
    return %c0_i32, %c0_i32_0 : i32, i32
  }
  func.func @transform_9(%arg0: i32) -> (i32, i32) {
    %c0_i32 = arith.constant 0 : i32
    %c0_i32_0 = arith.constant 0 : i32
    %c0_i32_1 = arith.constant 0 : i32
    return %c0_i32, %c0_i32_0 : i32, i32
  }
  func.func @transform_10(%arg0: i32) -> (i32, i32) {
    %c0_i32 = arith.constant 0 : i32
    %c0_i32_0 = arith.constant 0 : i32
    %c0_i32_1 = arith.constant 0 : i32
    return %c0_i32, %c0_i32_0 : i32, i32
  }
  func.func @transform_11(%arg0: i32) -> (i32, i32) {
    %c0_i32 = arith.constant 0 : i32
    %c0_i32_0 = arith.constant 0 : i32
    %c0_i32_1 = arith.constant 0 : i32
    return %c0_i32, %c0_i32_0 : i32, i32
  }
  func.func @transform_12(%arg0: i32) -> (i32, i32) {
    %c0_i32 = arith.constant 0 : i32
    %c0_i32_0 = arith.constant 0 : i32
    %c0_i32_1 = arith.constant 0 : i32
    return %c0_i32, %c0_i32_0 : i32, i32
  }
  func.func @transform_13(%arg0: i32) -> (i32, i32) {
    %c0_i32 = arith.constant 0 : i32
    %c0_i32_0 = arith.constant 0 : i32
    %c0_i32_1 = arith.constant 0 : i32
    return %c0_i32, %c0_i32_0 : i32, i32
  }
  func.func @transform_14(%arg0: i32) -> (i32, i32) {
    %c0_i32 = arith.constant 0 : i32
    %c0_i32_0 = arith.constant 0 : i32
    %c0_i32_1 = arith.constant 0 : i32
    return %c0_i32, %c0_i32_0 : i32, i32
  }
  func.func @transform_15(%arg0: i32) -> (i32, i32) {
    %c0_i32 = arith.constant 0 : i32
    %c0_i32_0 = arith.constant 0 : i32
    %c0_i32_1 = arith.constant 0 : i32
    return %c0_i32, %c0_i32_0 : i32, i32
  }
  func.func @transform_16(%arg0: i32) -> (i32, i32) {
    %c0_i32 = arith.constant 0 : i32
    %c0_i32_0 = arith.constant 0 : i32
    %c0_i32_1 = arith.constant 0 : i32
    return %c0_i32, %c0_i32_0 : i32, i32
  }
  func.func @transform_17(%arg0: i32) -> (i32, i32) {
    %c0_i32 = arith.constant 0 : i32
    %c0_i32_0 = arith.constant 0 : i32
    %c0_i32_1 = arith.constant 0 : i32
    return %c0_i32, %c0_i32_0 : i32, i32
  }
  func.func @transform_18(%arg0: i32) -> (i32, i32) {
    %c0_i32 = arith.constant 0 : i32
    %c0_i32_0 = arith.constant 0 : i32
    %c0_i32_1 = arith.constant 0 : i32
    return %c0_i32, %c0_i32_0 : i32, i32
  }
  func.func @transform_19(%arg0: i32) -> (i32, i32) {
    %c0_i32 = arith.constant 0 : i32
    %c0_i32_0 = arith.constant 0 : i32
    return %arg0, %c0_i32 : i32, i32
  }
  func.func @transform_20(%arg0: i32) -> (i32, i32) {
    %c0_i32 = arith.constant 0 : i32
    %c0_i32_0 = arith.constant 0 : i32
    return %arg0, %c0_i32 : i32, i32
  }
  func.func @transform_21(%arg0: i32) -> (i32, i32) {
    %c0_i32 = arith.constant 0 : i32
    %c0_i32_0 = arith.constant 0 : i32
    return %arg0, %c0_i32 : i32, i32
  }
  func.func @transform_22(%arg0: i32) -> (i32, i32) {
    %c0_i32 = arith.constant 0 : i32
    %c0_i32_0 = arith.constant 0 : i32
    return %arg0, %c0_i32 : i32, i32
  }
}

</mosaic_0001>

<llo_original>
// kernel: tpu_custom_call.1
$region0: #{tpu_custom_call.1}
  #allocation0 [shape = 'u32[]', space=smem, size = 0x4, offset = 0x4, fixed_abs, tag = 'smem constant byte address 0x4 - core index']
  #allocation1 [shape = 'u32[144,128]{1,0:T(1,128)}', space=vmem, size = 0x12000, scoped, tag = 'internal scratch']
  %s0 = inlined_call_operand.hbm [shape: f32[8,8,128], index: 0, kind: input, shape index: {}]
  %s1 = inlined_call_operand.hbm [shape: f32[8,128], index: 1, kind: input, shape index: {}]
  %s2 = inlined_call_operand.vmem [shape: bf16[128,256], index: 2, kind: input, shape index: {}]
  %s3 = inlined_call_operand.vmem [shape: f32[1,256], index: 3, kind: input, shape index: {}]
  %s4 = inlined_call_operand.vmem [shape: bf16[256,128], index: 4, kind: input, shape index: {}]
  %s5 = inlined_call_operand.vmem [shape: f32[1,128], index: 5, kind: input, shape index: {}]
  %s6 = inlined_call_operand.vmem [shape: bf16[128,64], index: 6, kind: input, shape index: {}]
  %s7 = inlined_call_operand.vmem [shape: f32[1,64], index: 7, kind: input, shape index: {}]
  %s8 = inlined_call_operand.hbm [shape: bf16[64,128], index: 8, kind: input, shape index: {}]
  %s9 = inlined_call_operand.vmem [shape: f32[1,128], index: 9, kind: input, shape index: {}]
  %s10 = inlined_call_operand.hbm [shape: bf16[128,128], index: 10, kind: input, shape index: {}]
  %s11 = inlined_call_operand.vmem [shape: f32[1,128], index: 11, kind: input, shape index: {}]
  %s12 = inlined_call_operand.hbm [shape: bf16[128,128], index: 12, kind: input, shape index: {}]
  %s13 = inlined_call_operand.vmem [shape: f32[1,128], index: 13, kind: input, shape index: {}]
  %s14 = inlined_call_operand.vmem [shape: bf16[128,64], index: 14, kind: input, shape index: {}]
  %s15 = inlined_call_operand.vmem [shape: bf16[128,64], index: 15, kind: input, shape index: {}]
  %s16 = inlined_call_operand.vmem [shape: f32[1,64], index: 16, kind: input, shape index: {}]
  %s17 = inlined_call_operand.hbm [shape: bf16[64,128], index: 17, kind: input, shape index: {}]
  %s18 = inlined_call_operand.vmem [shape: f32[1,128], index: 18, kind: input, shape index: {}]
  %s19 = inlined_call_operand.hbm [shape: f32[8,128], index: 19, kind: output, shape index: {0}]
  %s20 = inlined_call_operand.hbm [shape: f32[8,128], index: 20, kind: output, shape index: {1}]
  %s21 = inlined_call_operand.hbm [shape: f32[8,128], index: 21, kind: output, shape index: {2}]
  %s22 = inlined_call_operand.hbm [shape: f32[8,128], index: 22, kind: output, shape index: {3}]
  %23 = xla_tuple %s19, %s20, %s21, %s22
  %s24 = sld [smem:[#allocation0]]
  $region134: #{tpu_custom_call.1} parent=0
    _
  %s26 = ssub.s32 1, %s24
  %s27 = scalar_select 0, %s26, %s24
  $region1: #{tpu_custom_call.1} parent=0
    #allocation2 [shape = 'u8[32768]{0}', space=vmem, size = 0x8000, scoped, tag = 'input window, operand 0, single buffered']
    #allocation3 [shape = 's32[1]{0}', space=sflag, size = 0x4, scoped, tag = 'scoped memory for tpu_custom_call.1']
    #allocation4 [shape = 's32[1]{0}', space=sflag, size = 0x4, scoped, tag = 'scoped memory for tpu_custom_call.1']
    #allocation5 [shape = 'u8[4096]{0}', space=vmem, size = 0x1000, scoped, tag = 'input window, operand 1, single buffered']
    #allocation6 [shape = 's32[1]{0}', space=sflag, size = 0x4, scoped, tag = 'scoped memory for tpu_custom_call.1']
    #allocation7 [shape = 'u8[16384]{0}', space=vmem, size = 0x4000, scoped, tag = 'input window, operand 8, single buffered']
    #allocation8 [shape = 'u8[32768]{0}', space=vmem, size = 0x8000, scoped, tag = 'input window, operand 10, single buffered']
    #allocation9 [shape = 's32[1]{0}', space=sflag, size = 0x4, scoped, tag = 'scoped memory for tpu_custom_call.1']
    #allocation10 [shape = 'u8[32768]{0}', space=vmem, size = 0x8000, scoped, tag = 'input window, operand 12, single buffered']
    #allocation11 [shape = 'u8[16384]{0}', space=vmem, size = 0x4000, scoped, tag = 'input window, operand 17, single buffered']
    #allocation12 [shape = 's32[1]{0}', space=sflag, size = 0x4, scoped, tag = 'scoped memory for tpu_custom_call.1']
    #allocation13 [shape = 'u8[4096]{0}', space=vmem, size = 0x1000, scoped, tag = 'output window, operand 0, single buffered']
    #allocation14 [shape = 'u8[4096]{0}', space=vmem, size = 0x1000, scoped, tag = 'output window, operand 1, single buffered']
    #allocation15 [shape = 's32[1]{0}', space=sflag, size = 0x4, scoped, tag = 'scoped memory for tpu_custom_call.1']
    #allocation16 [shape = 'u8[4096]{0}', space=vmem, size = 0x1000, scoped, tag = 'output window, operand 2, single buffered']
    #allocation17 [shape = 'u8[4096]{0}', space=vmem, size = 0x1000, scoped, tag = 'output window, operand 3, single buffered']
    #allocation18 [shape = 's32[1]{0}', space=sflag, size = 0x4, scoped, tag = 'scoped memory for tpu_custom_call.1']
    %28 = vsyncpa [#allocation3], 0
    %29 = vsyncpa [#allocation6], 0
    %30 = vsyncpa [#allocation9], 0
    %31 = vsyncpa [#allocation12], 0
    %32 = vsyncpa [#allocation4], 0
    %33 = vsyncpa [#allocation15], 0
    %34 = vsyncpa [#allocation18], 0
    // Predicated region
    $region2: #{tpu_custom_call.1} parent=1 // pred_check
      _
    $region3: #{tpu_custom_call.1} parent=1 // pred_check_branch
      %36 = sbr.rel (0) target = $region5
    $region4: #{tpu_custom_call.1} parent=1 // pred_region
      %s38 = ssub.s32 1024, 1024
      %39 = vsyncadd [#allocation3], %s38
      %s40 = sshll.u32 [#allocation2], 4
      %s41 = int_to_ptr.vmem [resolvable:$true] %s40
      %46 = dma.hbm_to_vmem [thread:$0]  %s0, 1024, %s41, [#allocation3], 128, 128, 8
    $region5: #{tpu_custom_call.1} parent=1 // pred_fallthru
      _
    // Predicated region
    $region6: #{tpu_custom_call.1} parent=1 // pred_check
      _
    $region7: #{tpu_custom_call.1} parent=1 // pred_check_branch
      %48 = sbr.rel (0) target = $region9
    $region8: #{tpu_custom_call.1} parent=1 // pred_region
      %s50 = ssub.s32 128, 128
      %51 = vsyncadd [#allocation6], %s50
      %s53 = sshll.u32 [#allocation5], 4
      %s54 = int_to_ptr.vmem [resolvable:$true] %s53
      %56 = dma.hbm_to_vmem [thread:$0]  %s1, 128, %s54, [#allocation6]
    $region9: #{tpu_custom_call.1} parent=1 // pred_fallthru
      _
    // Predicated region
    $region10: #{tpu_custom_call.1} parent=1 // pred_check
      _
    $region11: #{tpu_custom_call.1} parent=1 // pred_check_branch
      %58 = sbr.rel (0) target = $region13
    $region12: #{tpu_custom_call.1} parent=1 // pred_region
      _
    $region13: #{tpu_custom_call.1} parent=1 // pred_fallthru
      _
    // Predicated region
    $region14: #{tpu_custom_call.1} parent=1 // pred_check
      _
    $region15: #{tpu_custom_call.1} parent=1 // pred_check_branch
      %60 = sbr.rel (0) target = $region17
    $region16: #{tpu_custom_call.1} parent=1 // pred_region
      _
    $region17: #{tpu_custom_call.1} parent=1 // pred_fallthru
      _
    // Predicated region
    $region18: #{tpu_custom_call.1} parent=1 // pred_check
      _
    $region19: #{tpu_custom_call.1} parent=1 // pred_check_branch
      %62 = sbr.rel (0) target = $region21
    $region20: #{tpu_custom_call.1} parent=1 // pred_region
      _
    $region21: #{tpu_custom_call.1} parent=1 // pred_fallthru
      _
    // Predicated region
    $region22: #{tpu_custom_call.1} parent=1 // pred_check
      _
    $region23: #{tpu_custom_call.1} parent=1 // pred_check_branch
      %64 = sbr.rel (0) target = $region25
    $region24: #{tpu_custom_call.1} parent=1 // pred_region
      _
    $region25: #{tpu_custom_call.1} parent=1 // pred_fallthru
      _
    // Predicated region
    $region26: #{tpu_custom_call.1} parent=1 // pred_check
      _
    $region27: #{tpu_custom_call.1} parent=1 // pred_check_branch
      %66 = sbr.rel (0) target = $region29
    $region28: #{tpu_custom_call.1} parent=1 // pred_region
      _
    $region29: #{tpu_custom_call.1} parent=1 // pred_fallthru
      _
    // Predicated region
    $region30: #{tpu_custom_call.1} parent=1 // pred_check
      _
    $region31: #{tpu_custom_call.1} parent=1 // pred_check_branch
      %68 = sbr.rel (0) target = $region33
    $region32: #{tpu_custom_call.1} parent=1 // pred_region
      _
    $region33: #{tpu_custom_call.1} parent=1 // pred_fallthru
      _
    // Predicated region
    $region34: #{tpu_custom_call.1} parent=1 // pred_check
      _
    $region35: #{tpu_custom_call.1} parent=1 // pred_check_branch
      %70 = sbr.rel (0) target = $region37
    $region36: #{tpu_custom_call.1} parent=1 // pred_region
      %s72 = ssub.s32 512, 512
      %73 = vsyncadd [#allocation6], %s72
      %s74 = sshll.u32 [#allocation7], 4
      %s75 = int_to_ptr.vmem [resolvable:$true] %s74
      %80 = dma.hbm_to_vmem [thread:$0]  %s8, 512, %s75, [#allocation6], 64, 64, 4
    $region37: #{tpu_custom_call.1} parent=1 // pred_fallthru
      _
    // Predicated region
    $region38: #{tpu_custom_call.1} parent=1 // pred_check
      _
    $region39: #{tpu_custom_call.1} parent=1 // pred_check_branch
      %82 = sbr.rel (0) target = $region41
    $region40: #{tpu_custom_call.1} parent=1 // pred_region
      _
    $region41: #{tpu_custom_call.1} parent=1 // pred_fallthru
      _
    // Predicated region
    $region42: #{tpu_custom_call.1} parent=1 // pred_check
      _
    $region43: #{tpu_custom_call.1} parent=1 // pred_check_branch
      %84 = sbr.rel (0) target = $region45
    $region44: #{tpu_custom_call.1} parent=1 // pred_region
      %s86 = ssub.s32 1024, 1024
      %87 = vsyncadd [#allocation9], %s86
      %s88 = sshll.u32 [#allocation8], 4
      %s89 = int_to_ptr.vmem [resolvable:$true] %s88
      %94 = dma.hbm_to_vmem [thread:$0]  %s10, 1024, %s89, [#allocation9], 64, 64, 4
    $region45: #{tpu_custom_call.1} parent=1 // pred_fallthru
      _
    // Predicated region
    $region46: #{tpu_custom_call.1} parent=1 // pred_check
      _
    $region47: #{tpu_custom_call.1} parent=1 // pred_check_branch
      %96 = sbr.rel (0) target = $region49
    $region48: #{tpu_custom_call.1} parent=1 // pred_region
      _
    $region49: #{tpu_custom_call.1} parent=1 // pred_fallthru
      _
    // Predicated region
    $region50: #{tpu_custom_call.1} parent=1 // pred_check
      _
    $region51: #{tpu_custom_call.1} parent=1 // pred_check_branch
      %98 = sbr.rel (0) target = $region53
    $region52: #{tpu_custom_call.1} parent=1 // pred_region
      %s100 = ssub.s32 1024, 1024
      %101 = vsyncadd [#allocation9], %s100
      %s102 = sshll.u32 [#allocation10], 4
      %s103 = int_to_ptr.vmem [resolvable:$true] %s102
      %108 = dma.hbm_to_vmem [thread:$0]  %s12, 1024, %s103, [#allocation9], 64, 64, 4
    $region53: #{tpu_custom_call.1} parent=1 // pred_fallthru
      _
    // Predicated region
    $region54: #{tpu_custom_call.1} parent=1 // pred_check
      _
    $region55: #{tpu_custom_call.1} parent=1 // pred_check_branch
      %110 = sbr.rel (0) target = $region57
    $region56: #{tpu_custom_call.1} parent=1 // pred_region
      _
    $region57: #{tpu_custom_call.1} parent=1 // pred_fallthru
      _
    // Predicated region
    $region58: #{tpu_custom_call.1} parent=1 // pred_check
      _
    $region59: #{tpu_custom_call.1} parent=1 // pred_check_branch
      %112 = sbr.rel (0) target = $region61
    $region60: #{tpu_custom_call.1} parent=1 // pred_region
      _
    $region61: #{tpu_custom_call.1} parent=1 // pred_fallthru
      _
    // Predicated region
    $region62: #{tpu_custom_call.1} parent=1 // pred_check
      _
    $region63: #{tpu_custom_call.1} parent=1 // pred_check_branch
      %114 = sbr.rel (0) target = $region65
    $region64: #{tpu_custom_call.1} parent=1 // pred_region
      _
    $region65: #{tpu_custom_call.1} parent=1 // pred_fallthru
      _
    // Predicated region
    $region66: #{tpu_custom_call.1} parent=1 // pred_check
      _
    $region67: #{tpu_custom_call.1} parent=1 // pred_check_branch
      %116 = sbr.rel (0) target = $region69
    $region68: #{tpu_custom_call.1} parent=1 // pred_region
      _
    $region69: #{tpu_custom_call.1} parent=1 // pred_fallthru
      _
    // Predicated region
    $region70: #{tpu_custom_call.1} parent=1 // pred_check
      _
    $region71: #{tpu_custom_call.1} parent=1 // pred_check_branch
      %118 = sbr.rel (0) target = $region73
    $region72: #{tpu_custom_call.1} parent=1 // pred_region
      %s120 = ssub.s32 512, 512
      %121 = vsyncadd [#allocation12], %s120
      %s122 = sshll.u32 [#allocation11], 4
      %s123 = int_to_ptr.vmem [resolvable:$true] %s122
      %128 = dma.hbm_to_vmem [thread:$0]  %s17, 512, %s123, [#allocation12], 64, 64, 4
    $region73: #{tpu_custom_call.1} parent=1 // pred_fallthru
      _
    // Predicated region
    $region74: #{tpu_custom_call.1} parent=1 // pred_check
      _
    $region75: #{tpu_custom_call.1} parent=1 // pred_check_branch
      %130 = sbr.rel (0) target = $region77
    $region76: #{tpu_custom_call.1} parent=1 // pred_region
      _
    $region77: #{tpu_custom_call.1} parent=1 // pred_fallthru
      _
    // Predicated region
    $region78: #{tpu_custom_call.1} parent=1 // pred_check
      _
    $region79: #{tpu_custom_call.1} parent=1 // pred_check_branch
      %132 = sbr.rel (0) target = $region81
    $region80: #{tpu_custom_call.1} parent=1 // pred_region
      %133 = dma.done [#allocation3], 1024
    $region81: #{tpu_custom_call.1} parent=1 // pred_fallthru
      _
    // Predicated region
    $region82: #{tpu_custom_call.1} parent=1 // pred_check
      _
    $region83: #{tpu_custom_call.1} parent=1 // pred_check_branch
      %135 = sbr.rel (0) target = $region85
    $region84: #{tpu_custom_call.1} parent=1 // pred_region
      %136 = dma.done [#allocation6], 128
    $region85: #{tpu_custom_call.1} parent=1 // pred_fallthru
      _
    // Predicated region
    $region86: #{tpu_custom_call.1} parent=1 // pred_check
      _
    $region87: #{tpu_custom_call.1} parent=1 // pred_check_branch
      %138 = sbr.rel (0) target = $region89
    $region88: #{tpu_custom_call.1} parent=1 // pred_region
      %139 = dma.done [#allocation6], 512
    $region89: #{tpu_custom_call.1} parent=1 // pred_fallthru
      _
    // Predicated region
    $region90: #{tpu_custom_call.1} parent=1 // pred_check
      _
    $region91: #{tpu_custom_call.1} parent=1 // pred_check_branch
      %141 = sbr.rel (0) target = $region93
    $region92: #{tpu_custom_call.1} parent=1 // pred_region
      %142 = dma.done [#allocation9], 1024
    $region93: #{tpu_custom_call.1} parent=1 // pred_fallthru
      _
    // Predicated region
    $region94: #{tpu_custom_call.1} parent=1 // pred_check
      _
    $region95: #{tpu_custom_call.1} parent=1 // pred_check_branch
      %144 = sbr.rel (0) target = $region97
    $region96: #{tpu_custom_call.1} parent=1 // pred_region
      %145 = dma.done [#allocation9], 1024
    $region97: #{tpu_custom_call.1} parent=1 // pred_fallthru
      _
    // Predicated region
    $region98: #{tpu_custom_call.1} parent=1 // pred_check
      _
    $region99: #{tpu_custom_call.1} parent=1 // pred_check_branch
      %147 = sbr.rel (0) target = $region101
    $region100: #{tpu_custom_call.1} parent=1 // pred_region
      %148 = dma.done [#allocation12], 512
    $region101: #{tpu_custom_call.1} parent=1 // pred_fallthru
      _
    %v150 = vld [vmem:[#allocation2] sm:$0xff]
    %v151 = vld [vmem:[#allocation2 + $0x8] sm:$0xff]
    %v152 = vld [vmem:[#allocation2 + $0x10] sm:$0xff]
    %v153 = vld [vmem:[#allocation2 + $0x18] sm:$0xff]
    %v154 = vld [vmem:[#allocation2 + $0x20] sm:$0xff]
    %v155 = vld [vmem:[#allocation2 + $0x28] sm:$0xff]
    %v156 = vld [vmem:[#allocation2 + $0x30] sm:$0xff]
    %v157 = vld [vmem:[#allocation2 + $0x38] sm:$0xff]
    %v158 = vmul.f32 %v150, %v150
    %v159 = vmul.f32 %v151, %v151
    %v160 = vmul.f32 %v152, %v152
    %v161 = vmul.f32 %v153, %v153
    %v162 = vmul.f32 %v154, %v154
    %v163 = vmul.f32 %v155, %v155
    %v164 = vmul.f32 %v156, %v156
    %v165 = vmul.f32 %v157, %v157
    %166 = vadd.xlane.f32.xlu0 %v158
    %v167 = vpop.xlane.xlu0 %166
    %168 = vadd.xlane.f32.xlu0 %v159
    %v169 = vpop.xlane.xlu0 %168
    %170 = vadd.xlane.f32.xlu0 %v160
    %v171 = vpop.xlane.xlu0 %170
    %172 = vadd.xlane.f32.xlu0 %v161
    %v173 = vpop.xlane.xlu0 %172
    %174 = vadd.xlane.f32.xlu0 %v162
    %v175 = vpop.xlane.xlu0 %174
    %176 = vadd.xlane.f32.xlu0 %v163
    %v177 = vpop.xlane.xlu0 %176
    %178 = vadd.xlane.f32.xlu0 %v164
    %v179 = vpop.xlane.xlu0 %178
    %180 = vadd.xlane.f32.xlu0 %v165
    %v181 = vpop.xlane.xlu0 %180
    %v182 = vmax.f32 %v167, 1e-24
    %v183 = vmax.f32 %v169, 1e-24
    %v184 = vmax.f32 %v171, 1e-24
    %v185 = vmax.f32 %v173, 1e-24
    %v186 = vmax.f32 %v175, 1e-24
    %v187 = vmax.f32 %v177, 1e-24
    %v188 = vmax.f32 %v179, 1e-24
    %v189 = vmax.f32 %v181, 1e-24
    %v190 = vrsqrt.pop %v182
    %v191 = vrsqrt.pop %v183
    %v192 = vrsqrt.pop %v184
    %v193 = vrsqrt.pop %v185
    %v194 = vrsqrt.pop %v186
    %v195 = vrsqrt.pop %v187
    %v196 = vrsqrt.pop %v188
    %v197 = vrsqrt.pop %v189
    %v198 = vmul.f32 %v150, %v190
    %v199 = vmul.f32 %v151, %v191
    %v200 = vmul.f32 %v152, %v192
    %v201 = vmul.f32 %v153, %v193
    %v202 = vmul.f32 %v154, %v194
    %v203 = vmul.f32 %v155, %v195
    %v204 = vmul.f32 %v156, %v196
    %v205 = vmul.f32 %v157, %v197
    %v206 = vpack.c.bf16 %v199, %v198
    %v207 = vpack.c.bf16 %v201, %v200
    %v208 = vpack.c.bf16 %v203, %v202
    %v209 = vpack.c.bf16 %v205, %v204
    %v210 = vld [vmem:[%s2] sm:$0xff]
    %v211 = vld [vmem:[%s2 + $0x8] sm:$0xff]
    %v212 = vld [vmem:[%s2 + $0x10] sm:$0xff]
    %v213 = vld [vmem:[%s2 + $0x18] sm:$0xff]
    %v214 = vld [vmem:[%s2 + $0x20] sm:$0xff]
    %v215 = vld [vmem:[%s2 + $0x28] sm:$0xff]
    %v216 = vld [vmem:[%s2 + $0x30] sm:$0xff]
    %v217 = vld [vmem:[%s2 + $0x38] sm:$0xff]
    %v218 = vld [vmem:[%s2 + $0x40] sm:$0xff]
    %v219 = vld [vmem:[%s2 + $0x48] sm:$0xff]
    %v220 = vld [vmem:[%s2 + $0x50] sm:$0xff]
    %v221 = vld [vmem:[%s2 + $0x58] sm:$0xff]
    %v222 = vld [vmem:[%s2 + $0x60] sm:$0xff]
    %v223 = vld [vmem:[%s2 + $0x68] sm:$0xff]
    %v224 = vld [vmem:[%s2 + $0x70] sm:$0xff]
    %v225 = vld [vmem:[%s2 + $0x78] sm:$0xff]
    %v226 = vld [vmem:[%s3] sm:$0x3]
    %v228 = vlaneseq
    %v229 = vshrl.u32 %v228, 7
    %v230 = vsub.s32 0, %v229
    %v231 = vrot.slane %v226, %v230
    %v232 = vlaneseq
    %v233 = vshrl.u32 %v232, 7
    %v234 = vsub.s32 1, %v233
    %v235 = vrot.slane %v226, %v234
    %v254 = vunpack.c.l.b16 %v210
    %v255 = vunpack.c.h.b16 %v210
    %v256 = vunpack.c.l.b16 %v211
    %v257 = vunpack.c.h.b16 %v211
    %v258 = vunpack.c.l.b16 %v212
    %v259 = vunpack.c.h.b16 %v212
    %v260 = vunpack.c.l.b16 %v213
    %v261 = vunpack.c.h.b16 %v213
    %v262 = vunpack.c.l.b16 %v214
    %v263 = vunpack.c.h.b16 %v214
    %v264 = vunpack.c.l.b16 %v215
    %v265 = vunpack.c.h.b16 %v215
    %v266 = vunpack.c.l.b16 %v216
    %v267 = vunpack.c.h.b16 %v216
    %v268 = vunpack.c.l.b16 %v217
    %v269 = vunpack.c.h.b16 %v217
    %v270 = vunpack.c.l.b16 %v218
    %v271 = vunpack.c.h.b16 %v218
    %v272 = vunpack.c.l.b16 %v219
    %v273 = vunpack.c.h.b16 %v219
    %v274 = vunpack.c.l.b16 %v220
    %v275 = vunpack.c.h.b16 %v220
    %v276 = vunpack.c.l.b16 %v221
    %v277 = vunpack.c.h.b16 %v221
    %v278 = vunpack.c.l.b16 %v222
    %v279 = vunpack.c.h.b16 %v222
    %v280 = vunpack.c.l.b16 %v223
    %v281 = vunpack.c.h.b16 %v223
    %v282 = vunpack.c.l.b16 %v224
    %v283 = vunpack.c.h.b16 %v224
    %v284 = vunpack.c.l.b16 %v225
    %v285 = vunpack.c.h.b16 %v225
    %v286 = vpack.c.b16 %v256, %v254
    %v287 = vpack.c.b16 %v257, %v255
    %v288 = vpack.c.b16 %v260, %v258
    %v289 = vpack.c.b16 %v261, %v259
    %v290 = vpack.c.b16 %v264, %v262
    %v291 = vpack.c.b16 %v265, %v263
    %v292 = vpack.c.b16 %v268, %v266
    %v293 = vpack.c.b16 %v269, %v267
    %v294 = vpack.c.b16 %v272, %v270
    %v295 = vpack.c.b16 %v273, %v271
    %v296 = vpack.c.b16 %v276, %v274
    %v297 = vpack.c.b16 %v277, %v275
    %v298 = vpack.c.b16 %v280, %v278
    %v299 = vpack.c.b16 %v281, %v279
    %v300 = vpack.c.b16 %v284, %v282
    %v301 = vpack.c.b16 %v285, %v283
    %318 = vmatprep.subr.bf16.mxu0 %v301
    %319 = vmatpush1.bf16.msra.mxu0 %v300
    %320 = vmatprep.subr.bf16.mxu0 %v299
    %321 = vmatpush1.bf16.msra.mxu0 %v298
    %322 = vmatprep.subr.bf16.mxu0 %v297
    %323 = vmatpush1.bf16.msra.mxu0 %v296
    %324 = vmatprep.subr.bf16.mxu0 %v295
    %325 = vmatpush1.bf16.msra.mxu0 %v294
    %326 = vmatprep.subr.bf16.mxu0 %v293
    %327 = vmatpush1.bf16.msra.mxu0 %v292
    %328 = vmatprep.subr.bf16.mxu0 %v291
    %329 = vmatpush1.bf16.msra.mxu0 %v290
    %330 = vmatprep.subr.bf16.mxu0 %v289
    %331 = vmatpush1.bf16.msra.mxu0 %v288
    %332 = vmatprep.subr.bf16.mxu0 %v287
    %333 = vmatpush1.bf16.msra.mxu0 %v286
    %334 = vmatprep.subr.bf16.mxu0 0
    %335 = vmatpush2.bf16.msra.mxu0 0
    %336 = vmatprep.subr.bf16.mxu0 0
    %337 = vmatpush2.bf16.msra.mxu0 0
    %338 = vmatprep.subr.bf16.mxu0 0
    %339 = vmatpush2.bf16.msra.mxu0 0
    %340 = vmatprep.subr.bf16.mxu0 0
    %341 = vmatpush2.bf16.msra.mxu0 0
    %342 = vmatprep.subr.bf16.mxu0 0
    %343 = vmatpush2.bf16.msra.mxu0 0
    %344 = vmatprep.subr.bf16.mxu0 0
    %345 = vmatpush2.bf16.msra.mxu0 0
    %346 = vmatprep.subr.bf16.mxu0 0
    %347 = vmatpush2.bf16.msra.mxu0 0
    %348 = vmatprep.subr.bf16.mxu0 0
    %349 = vmatpush2.bf16.msra.mxu0 0
    %350 = vmatprep.mubr.bf16.mxu0 0
    %351 = vmatmul.mubr.bf16.gmra.mxu0 %v206
    %v352 = vpop.f32.mrf.mxu0
    %v353 = vadd.f32 %v231, %v352
    %v354 = vpop.f32.mrf.mxu0
    %v355 = vadd.f32 %v235, %v354
    %v356 = vpop.f32.mrf.mxu0
    %v357 = vadd.f32 %v231, %v356
    %v358 = vpop.f32.mrf.mxu0
    %v359 = vadd.f32 %v235, %v358
    %360 = vmatprep.mubr.bf16.mxu0 0
    %361 = vmatmul.mubr.bf16.gmra.mxu0 %v207
    %v362 = vpop.f32.mrf.mxu0
    %v363 = vadd.f32 %v231, %v362
    %v364 = vpop.f32.mrf.mxu0
    %v365 = vadd.f32 %v235, %v364
    %v366 = vpop.f32.mrf.mxu0
    %v367 = vadd.f32 %v231, %v366
    %v368 = vpop.f32.mrf.mxu0
    %v369 = vadd.f32 %v235, %v368
    %370 = vmatprep.mubr.bf16.mxu0 0
    %371 = vmatmul.mubr.bf16.gmra.mxu0 %v208
    %v372 = vpop.f32.mrf.mxu0
    %v373 = vadd.f32 %v231, %v372
    %v374 = vpop.f32.mrf.mxu0
    %v375 = vadd.f32 %v235, %v374
    %v376 = vpop.f32.mrf.mxu0
    %v377 = vadd.f32 %v231, %v376
    %v378 = vpop.f32.mrf.mxu0
    %v379 = vadd.f32 %v235, %v378
    %380 = vmatprep.mubr.bf16.mxu0 0
    %381 = vmatmul.mubr.bf16.gmra.mxu0 %v209
    %v382 = vpop.f32.mrf.mxu0
    %v383 = vadd.f32 %v231, %v382
    %v384 = vpop.f32.mrf.mxu0
    %v385 = vadd.f32 %v235, %v384
    %v386 = vpop.f32.mrf.mxu0
    %v387 = vadd.f32 %v231, %v386
    %v388 = vpop.f32.mrf.mxu0
    %v389 = vadd.f32 %v235, %v388
    %390 = vdwg.mxu0
    %vm391 = vcmp.gt.f32.partialorder %v353, 0.0
    %vm392 = vcmp.gt.f32.partialorder %v355, 0.0
    %vm393 = vcmp.gt.f32.partialorder %v357, 0.0
    %vm394 = vcmp.gt.f32.partialorder %v359, 0.0
    %vm395 = vcmp.gt.f32.partialorder %v363, 0.0
    %vm396 = vcmp.gt.f32.partialorder %v365, 0.0
    %vm397 = vcmp.gt.f32.partialorder %v367, 0.0
    %vm398 = vcmp.gt.f32.partialorder %v369, 0.0
    %vm399 = vcmp.gt.f32.partialorder %v373, 0.0
    %vm400 = vcmp.gt.f32.partialorder %v375, 0.0
    %vm401 = vcmp.gt.f32.partialorder %v377, 0.0
    %vm402 = vcmp.gt.f32.partialorder %v379, 0.0
    %vm403 = vcmp.gt.f32.partialorder %v383, 0.0
    %vm404 = vcmp.gt.f32.partialorder %v385, 0.0
    %vm405 = vcmp.gt.f32.partialorder %v387, 0.0
    %vm406 = vcmp.gt.f32.partialorder %v389, 0.0
    %v407 = vmul.f32 %v353, 0.01
    %v408 = vmul.f32 %v355, 0.01
    %v409 = vmul.f32 %v357, 0.01
    %v410 = vmul.f32 %v359, 0.01
    %v411 = vmul.f32 %v363, 0.01
    %v412 = vmul.f32 %v365, 0.01
    %v413 = vmul.f32 %v367, 0.01
    %v414 = vmul.f32 %v369, 0.01
    %v415 = vmul.f32 %v373, 0.01
    %v416 = vmul.f32 %v375, 0.01
    %v417 = vmul.f32 %v377, 0.01
    %v418 = vmul.f32 %v379, 0.01
    %v419 = vmul.f32 %v383, 0.01
    %v420 = vmul.f32 %v385, 0.01
    %v421 = vmul.f32 %v387, 0.01
    %v422 = vmul.f32 %v389, 0.01
    %v423 = vsel %vm391, %v353, %v407
    %v424 = vsel %vm392, %v355, %v408
    %v425 = vsel %vm393, %v357, %v409
    %v426 = vsel %vm394, %v359, %v410
    %v427 = vsel %vm395, %v363, %v411
    %v428 = vsel %vm396, %v365, %v412
    %v429 = vsel %vm397, %v367, %v413
    %v430 = vsel %vm398, %v369, %v414
    %v431 = vsel %vm399, %v373, %v415
    %v432 = vsel %vm400, %v375, %v416
    %v433 = vsel %vm401, %v377, %v417
    %v434 = vsel %vm402, %v379, %v418
    %v435 = vsel %vm403, %v383, %v419
    %v436 = vsel %vm404, %v385, %v420
    %v437 = vsel %vm405, %v387, %v421
    %v438 = vsel %vm406, %v389, %v422
    %v439 = vpack.c.bf16 %v425, %v423
    %v440 = vpack.c.bf16 %v426, %v424
    %v441 = vpack.c.bf16 %v429, %v427
    %v442 = vpack.c.bf16 %v430, %v428
    %v443 = vpack.c.bf16 %v433, %v431
    %v444 = vpack.c.bf16 %v434, %v432
    %v445 = vpack.c.bf16 %v437, %v435
    %v446 = vpack.c.bf16 %v438, %v436
    %v447 = vld [vmem:[%s4] sm:$0xf]
    %v448 = vld [vmem:[%s4 + $0x4] sm:$0xf]
    %v449 = vld [vmem:[%s4 + $0x8] sm:$0xf]
    %v450 = vld [vmem:[%s4 + $0xc] sm:$0xf]
    %v451 = vld [vmem:[%s4 + $0x10] sm:$0xf]
    %v452 = vld [vmem:[%s4 + $0x14] sm:$0xf]
    %v453 = vld [vmem:[%s4 + $0x18] sm:$0xf]
    %v454 = vld [vmem:[%s4 + $0x1c] sm:$0xf]
    %v455 = vld [vmem:[%s4 + $0x20] sm:$0xf]
    %v456 = vld [vmem:[%s4 + $0x24] sm:$0xf]
    %v457 = vld [vmem:[%s4 + $0x28] sm:$0xf]
    %v458 = vld [vmem:[%s4 + $0x2c] sm:$0xf]
    %v459 = vld [vmem:[%s4 + $0x30] sm:$0xf]
    %v460 = vld [vmem:[%s4 + $0x34] sm:$0xf]
    %v461 = vld [vmem:[%s4 + $0x38] sm:$0xf]
    %v462 = vld [vmem:[%s4 + $0x3c] sm:$0xf]
    %v463 = vld [vmem:[%s4 + $0x40] sm:$0xf]
    %v464 = vld [vmem:[%s4 + $0x44] sm:$0xf]
    %v465 = vld [vmem:[%s4 + $0x48] sm:$0xf]
    %v466 = vld [vmem:[%s4 + $0x4c] sm:$0xf]
    %v467 = vld [vmem:[%s4 + $0x50] sm:$0xf]
    %v468 = vld [vmem:[%s4 + $0x54] sm:$0xf]
    %v469 = vld [vmem:[%s4 + $0x58] sm:$0xf]
    %v470 = vld [vmem:[%s4 + $0x5c] sm:$0xf]
    %v471 = vld [vmem:[%s4 + $0x60] sm:$0xf]
    %v472 = vld [vmem:[%s4 + $0x64] sm:$0xf]
    %v473 = vld [vmem:[%s4 + $0x68] sm:$0xf]
    %v474 = vld [vmem:[%s4 + $0x6c] sm:$0xf]
    %v475 = vld [vmem:[%s4 + $0x70] sm:$0xf]
    %v476 = vld [vmem:[%s4 + $0x74] sm:$0xf]
    %v477 = vld [vmem:[%s4 + $0x78] sm:$0xf]
    %v478 = vld [vmem:[%s4 + $0x7c] sm:$0xf]
    %v479 = vld [vmem:[%s5] sm:$0x1]
    %v481 = vlaneseq
    %v482 = vshrl.u32 %v481, 7
    %v483 = vsub.s32 0, %v482
    %v484 = vrot.slane %v479, %v483
    %v518 = vunpack.c.l.b16 %v447
    %v519 = vunpack.c.l.b16 %v448
    %v520 = vunpack.c.l.b16 %v449
    %v521 = vunpack.c.l.b16 %v450
    %v522 = vunpack.c.l.b16 %v451
    %v523 = vunpack.c.l.b16 %v452
    %v524 = vunpack.c.l.b16 %v453
    %v525 = vunpack.c.l.b16 %v454
    %v526 = vunpack.c.l.b16 %v455
    %v527 = vunpack.c.l.b16 %v456
    %v528 = vunpack.c.l.b16 %v457
    %v529 = vunpack.c.l.b16 %v458
    %v530 = vunpack.c.l.b16 %v459
    %v531 = vunpack.c.l.b16 %v460
    %v532 = vunpack.c.l.b16 %v461
    %v533 = vunpack.c.l.b16 %v462
    %v534 = vunpack.c.l.b16 %v463
    %v535 = vunpack.c.l.b16 %v464
    %v536 = vunpack.c.l.b16 %v465
    %v537 = vunpack.c.l.b16 %v466
    %v538 = vunpack.c.l.b16 %v467
    %v539 = vunpack.c.l.b16 %v468
    %v540 = vunpack.c.l.b16 %v469
    %v541 = vunpack.c.l.b16 %v470
    %v542 = vunpack.c.l.b16 %v471
    %v543 = vunpack.c.l.b16 %v472
    %v544 = vunpack.c.l.b16 %v473
    %v545 = vunpack.c.l.b16 %v474
    %v546 = vunpack.c.l.b16 %v475
    %v547 = vunpack.c.l.b16 %v476
    %v548 = vunpack.c.l.b16 %v477
    %v549 = vunpack.c.l.b16 %v478
    %v550 = vpack.c.b16 %v519, %v518
    %v551 = vpack.c.b16 %v521, %v520
    %v552 = vpack.c.b16 %v523, %v522
    %v553 = vpack.c.b16 %v525, %v524
    %v554 = vpack.c.b16 %v527, %v526
    %v555 = vpack.c.b16 %v529, %v528
    %v556 = vpack.c.b16 %v531, %v530
    %v557 = vpack.c.b16 %v533, %v532
    %v558 = vpack.c.b16 %v535, %v534
    %v559 = vpack.c.b16 %v537, %v536
    %v560 = vpack.c.b16 %v539, %v538
    %v561 = vpack.c.b16 %v541, %v540
    %v562 = vpack.c.b16 %v543, %v542
    %v563 = vpack.c.b16 %v545, %v544
    %v564 = vpack.c.b16 %v547, %v546
    %v565 = vpack.c.b16 %v549, %v548
    %582 = vmatprep.subr.bf16.mxu0 0
    %583 = vmatpush1.bf16.msra.mxu0 %v557
    %584 = vmatprep.subr.bf16.mxu0 0
    %585 = vmatpush1.bf16.msra.mxu0 %v556
    %586 = vmatprep.subr.bf16.mxu0 0
    %587 = vmatpush1.bf16.msra.mxu0 %v555
    %588 = vmatprep.subr.bf16.mxu0 0
    %589 = vmatpush1.bf16.msra.mxu0 %v554
    %590 = vmatprep.subr.bf16.mxu0 0
    %591 = vmatpush1.bf16.msra.mxu0 %v553
    %592 = vmatprep.subr.bf16.mxu0 0
    %593 = vmatpush1.bf16.msra.mxu0 %v552
    %594 = vmatprep.subr.bf16.mxu0 0
    %595 = vmatpush1.bf16.msra.mxu0 %v551
    %596 = vmatprep.subr.bf16.mxu0 0
    %597 = vmatpush1.bf16.msra.mxu0 %v550
    %598 = vmatprep.subr.bf16.mxu0 0
    %599 = vmatpush2.bf16.msra.mxu0 %v565
    %600 = vmatprep.subr.bf16.mxu0 0
    %601 = vmatpush2.bf16.msra.mxu0 %v564
    %602 = vmatprep.subr.bf16.mxu0 0
    %603 = vmatpush2.bf16.msra.mxu0 %v563
    %604 = vmatprep.subr.bf16.mxu0 0
    %605 = vmatpush2.bf16.msra.mxu0 %v562
    %606 = vmatprep.subr.bf16.mxu0 0
    %607 = vmatpush2.bf16.msra.mxu0 %v561
    %608 = vmatprep.subr.bf16.mxu0 0
    %609 = vmatpush2.bf16.msra.mxu0 %v560
    %610 = vmatprep.subr.bf16.mxu0 0
    %611 = vmatpush2.bf16.msra.mxu0 %v559
    %612 = vmatprep.subr.bf16.mxu0 0
    %613 = vmatpush2.bf16.msra.mxu0 %v558
    %614 = vmatprep.mubr.bf16.mxu0 %v440
    %615 = vmatmul.mubr.bf16.gmra.mxu0 %v439
    %v616 = vpop.f32.mrf.mxu0
    %v617 = vadd.f32 %v484, %v616
    %v618 = vpop.f32.mrf.mxu0
    %v619 = vpop.f32.mrf.mxu0
    %v620 = vadd.f32 %v484, %v619
    %v621 = vpop.f32.mrf.mxu0
    %622 = vmatprep.mubr.bf16.mxu0 %v442
    %623 = vmatmul.mubr.bf16.gmra.mxu0 %v441
    %v624 = vpop.f32.mrf.mxu0
    %v625 = vadd.f32 %v484, %v624
    %v626 = vpop.f32.mrf.mxu0
    %v627 = vpop.f32.mrf.mxu0
    %v628 = vadd.f32 %v484, %v627
    %v629 = vpop.f32.mrf.mxu0
    %630 = vmatprep.mubr.bf16.mxu0 %v444
    %631 = vmatmul.mubr.bf16.gmra.mxu0 %v443
    %v632 = vpop.f32.mrf.mxu0
    %v633 = vadd.f32 %v484, %v632
    %v634 = vpop.f32.mrf.mxu0
    %v635 = vpop.f32.mrf.mxu0
    %v636 = vadd.f32 %v484, %v635
    %v637 = vpop.f32.mrf.mxu0
    %638 = vmatprep.mubr.bf16.mxu0 %v446
    %639 = vmatmul.mubr.bf16.gmra.mxu0 %v445
    %v640 = vpop.f32.mrf.mxu0
    %v641 = vadd.f32 %v484, %v640
    %v642 = vpop.f32.mrf.mxu0
    %v643 = vpop.f32.mrf.mxu0
    %v644 = vadd.f32 %v484, %v643
    %v645 = vpop.f32.mrf.mxu0
    %646 = vdwg.mxu0
    %vm647 = vcmp.gt.f32.partialorder %v617, 0.0
    %vm648 = vcmp.gt.f32.partialorder %v620, 0.0
    %vm649 = vcmp.gt.f32.partialorder %v625, 0.0
    %vm650 = vcmp.gt.f32.partialorder %v628, 0.0
    %vm651 = vcmp.gt.f32.partialorder %v633, 0.0
    %vm652 = vcmp.gt.f32.partialorder %v636, 0.0
    %vm653 = vcmp.gt.f32.partialorder %v641, 0.0
    %vm654 = vcmp.gt.f32.partialorder %v644, 0.0
    %v655 = vmul.f32 %v617, 0.01
    %v656 = vmul.f32 %v620, 0.01
    %v657 = vmul.f32 %v625, 0.01
    %v658 = vmul.f32 %v628, 0.01
    %v659 = vmul.f32 %v633, 0.01
    %v660 = vmul.f32 %v636, 0.01
    %v661 = vmul.f32 %v641, 0.01
    %v662 = vmul.f32 %v644, 0.01
    %v663 = vsel %vm647, %v617, %v655
    %v664 = vsel %vm648, %v620, %v656
    %v665 = vsel %vm649, %v625, %v657
    %v666 = vsel %vm650, %v628, %v658
    %v667 = vsel %vm651, %v633, %v659
    %v668 = vsel %vm652, %v636, %v660
    %v669 = vsel %vm653, %v641, %v661
    %v670 = vsel %vm654, %v644, %v662
    %v671 = vpack.c.bf16 %v664, %v663
    %v672 = vpack.c.bf16 %v666, %v665
    %v673 = vpack.c.bf16 %v668, %v667
    %v674 = vpack.c.bf16 %v670, %v669
    %v675 = vld [vmem:[%s6] sm:$0xf]
    %v676 = vld [vmem:[%s6 + $0x4] sm:$0xf]
    %v677 = vld [vmem:[%s6 + $0x8] sm:$0xf]
    %v678 = vld [vmem:[%s6 + $0xc] sm:$0xf]
    %v679 = vld [vmem:[%s6 + $0x10] sm:$0xf]
    %v680 = vld [vmem:[%s6 + $0x14] sm:$0xf]
    %v681 = vld [vmem:[%s6 + $0x18] sm:$0xf]
    %v682 = vld [vmem:[%s6 + $0x1c] sm:$0xf]
    %v683 = vld [vmem:[%s6 + $0x20] sm:$0xf]
    %v684 = vld [vmem:[%s6 + $0x24] sm:$0xf]
    %v685 = vld [vmem:[%s6 + $0x28] sm:$0xf]
    %v686 = vld [vmem:[%s6 + $0x2c] sm:$0xf]
    %v687 = vld [vmem:[%s6 + $0x30] sm:$0xf]
    %v688 = vld [vmem:[%s6 + $0x34] sm:$0xf]
    %v689 = vld [vmem:[%s6 + $0x38] sm:$0xf]
    %v690 = vld [vmem:[%s6 + $0x3c] sm:$0xf]
    %v691 = vld [vmem:[%s7] sm:$0x1]
    %v693 = vlaneseq
    %v694 = vshrl.u32 %v693, 7
    %v695 = vsub.s32 0, %v694
    %v696 = vrot.slane %v691, %v695
    %v714 = vunpack.c.l.b16 %v675
    %v715 = vunpack.c.l.b16 %v676
    %v716 = vunpack.c.l.b16 %v677
    %v717 = vunpack.c.l.b16 %v678
    %v718 = vunpack.c.l.b16 %v679
    %v719 = vunpack.c.l.b16 %v680
    %v720 = vunpack.c.l.b16 %v681
    %v721 = vunpack.c.l.b16 %v682
    %v722 = vunpack.c.l.b16 %v683
    %v723 = vunpack.c.l.b16 %v684
    %v724 = vunpack.c.l.b16 %v685
    %v725 = vunpack.c.l.b16 %v686
    %v726 = vunpack.c.l.b16 %v687
    %v727 = vunpack.c.l.b16 %v688
    %v728 = vunpack.c.l.b16 %v689
    %v729 = vunpack.c.l.b16 %v690
    %v730 = vpack.c.b16 %v715, %v714
    %v731 = vpack.c.b16 %v717, %v716
    %v732 = vpack.c.b16 %v719, %v718
    %v733 = vpack.c.b16 %v721, %v720
    %v734 = vpack.c.b16 %v723, %v722
    %v735 = vpack.c.b16 %v725, %v724
    %v736 = vpack.c.b16 %v727, %v726
    %v737 = vpack.c.b16 %v729, %v728
    %746 = vmatprep.subr.bf16.mxu0 0
    %747 = vmatpush1.bf16.msra.mxu0 %v737
    %748 = vmatprep.subr.bf16.mxu0 0
    %749 = vmatpush1.bf16.msra.mxu0 %v736
    %750 = vmatprep.subr.bf16.mxu0 0
    %751 = vmatpush1.bf16.msra.mxu0 %v735
    %752 = vmatprep.subr.bf16.mxu0 0
    %753 = vmatpush1.bf16.msra.mxu0 %v734
    %754 = vmatprep.subr.bf16.mxu0 0
    %755 = vmatpush1.bf16.msra.mxu0 %v733
    %756 = vmatprep.subr.bf16.mxu0 0
    %757 = vmatpush1.bf16.msra.mxu0 %v732
    %758 = vmatprep.subr.bf16.mxu0 0
    %759 = vmatpush1.bf16.msra.mxu0 %v731
    %760 = vmatprep.subr.bf16.mxu0 0
    %761 = vmatpush1.bf16.msra.mxu0 %v730
    %762 = vmatprep.subr.bf16.mxu0 0
    %763 = vmatpush2.bf16.msra.mxu0 0
    %764 = vmatprep.subr.bf16.mxu0 0
    %765 = vmatpush2.bf16.msra.mxu0 0
    %766 = vmatprep.subr.bf16.mxu0 0
    %767 = vmatpush2.bf16.msra.mxu0 0
    %768 = vmatprep.subr.bf16.mxu0 0
    %769 = vmatpush2.bf16.msra.mxu0 0
    %770 = vmatprep.subr.bf16.mxu0 0
    %771 = vmatpush2.bf16.msra.mxu0 0
    %772 = vmatprep.subr.bf16.mxu0 0
    %773 = vmatpush2.bf16.msra.mxu0 0
    %774 = vmatprep.subr.bf16.mxu0 0
    %775 = vmatpush2.bf16.msra.mxu0 0
    %776 = vmatprep.subr.bf16.mxu0 0
    %777 = vmatpush2.bf16.msra.mxu0 0
    %778 = vmatprep.mubr.bf16.mxu0 0
    %779 = vmatmul.mubr.bf16.gmra.mxu0 %v671
    %v780 = vpop.f32.mrf.mxu0
    %v781 = vadd.f32 %v696, %v780
    %v782 = vpop.f32.mrf.mxu0
    %v783 = vpop.f32.mrf.mxu0
    %v784 = vadd.f32 %v696, %v783
    %v785 = vpop.f32.mrf.mxu0
    %786 = vmatprep.mubr.bf16.mxu0 0
    %787 = vmatmul.mubr.bf16.gmra.mxu0 %v672
    %v788 = vpop.f32.mrf.mxu0
    %v789 = vadd.f32 %v696, %v788
    %v790 = vpop.f32.mrf.mxu0
    %v791 = vpop.f32.mrf.mxu0
    %v792 = vadd.f32 %v696, %v791
    %v793 = vpop.f32.mrf.mxu0
    %794 = vmatprep.mubr.bf16.mxu0 0
    %795 = vmatmul.mubr.bf16.gmra.mxu0 %v673
    %v796 = vpop.f32.mrf.mxu0
    %v797 = vadd.f32 %v696, %v796
    %v798 = vpop.f32.mrf.mxu0
    %v799 = vpop.f32.mrf.mxu0
    %v800 = vadd.f32 %v696, %v799
    %v801 = vpop.f32.mrf.mxu0
    %802 = vmatprep.mubr.bf16.mxu0 0
    %803 = vmatmul.mubr.bf16.gmra.mxu0 %v674
    %v804 = vpop.f32.mrf.mxu0
    %v805 = vadd.f32 %v696, %v804
    %v806 = vpop.f32.mrf.mxu0
    %v807 = vpop.f32.mrf.mxu0
    %v808 = vadd.f32 %v696, %v807
    %v809 = vpop.f32.mrf.mxu0
    %810 = vdwg.mxu0
    %vm811 = vcmp.gt.f32.partialorder %v781, 0.0
    %vm812 = vcmp.gt.f32.partialorder %v784, 0.0
    %vm813 = vcmp.gt.f32.partialorder %v789, 0.0
    %vm814 = vcmp.gt.f32.partialorder %v792, 0.0
    %vm815 = vcmp.gt.f32.partialorder %v797, 0.0
    %vm816 = vcmp.gt.f32.partialorder %v800, 0.0
    %vm817 = vcmp.gt.f32.partialorder %v805, 0.0
    %vm818 = vcmp.gt.f32.partialorder %v808, 0.0
    %v819 = vmul.f32 %v781, 0.01
    %v820 = vmul.f32 %v784, 0.01
    %v821 = vmul.f32 %v789, 0.01
    %v822 = vmul.f32 %v792, 0.01
    %v823 = vmul.f32 %v797, 0.01
    %v824 = vmul.f32 %v800, 0.01
    %v825 = vmul.f32 %v805, 0.01
    %v826 = vmul.f32 %v808, 0.01
    %v827 = vsel %vm811, %v781, %v819
    %v828 = vsel %vm812, %v784, %v820
    %v829 = vsel %vm813, %v789, %v821
    %v830 = vsel %vm814, %v792, %v822
    %v831 = vsel %vm815, %v797, %v823
    %v832 = vsel %vm816, %v800, %v824
    %v833 = vsel %vm817, %v805, %v825
    %v834 = vsel %vm818, %v808, %v826
    %v835 = vpack.c.bf16 %v828, %v827
    %v836 = vpack.c.bf16 %v830, %v829
    %v837 = vpack.c.bf16 %v832, %v831
    %v838 = vpack.c.bf16 %v834, %v833
    %v839 = vld [vmem:[#allocation7] sm:$0xf]
    %v840 = vld [vmem:[#allocation7 + $0x4] sm:$0xf]
    %v841 = vld [vmem:[#allocation7 + $0x8] sm:$0xf]
    %v842 = vld [vmem:[#allocation7 + $0xc] sm:$0xf]
    %v843 = vld [vmem:[#allocation7 + $0x10] sm:$0xf]
    %v844 = vld [vmem:[#allocation7 + $0x14] sm:$0xf]
    %v845 = vld [vmem:[#allocation7 + $0x18] sm:$0xf]
    %v846 = vld [vmem:[#allocation7 + $0x1c] sm:$0xf]
    %v847 = vld [vmem:[%s9] sm:$0x1]
    %v849 = vlaneseq
    %v850 = vshrl.u32 %v849, 7
    %v851 = vsub.s32 0, %v850
    %v852 = vrot.slane %v847, %v851
    %v862 = vunpack.c.l.b16 %v839
    %v863 = vunpack.c.l.b16 %v840
    %v864 = vunpack.c.l.b16 %v841
    %v865 = vunpack.c.l.b16 %v842
    %v866 = vunpack.c.l.b16 %v843
    %v867 = vunpack.c.l.b16 %v844
    %v868 = vunpack.c.l.b16 %v845
    %v869 = vunpack.c.l.b16 %v846
    %v870 = vpack.c.b16 %v863, %v862
    %v871 = vpack.c.b16 %v865, %v864
    %v872 = vpack.c.b16 %v867, %v866
    %v873 = vpack.c.b16 %v869, %v868
    %vm878 = vcmask 523264
    %v880 = vsel %vm878, %v835, 0
    %v883 = vsel %vm878, %v836, 0
    %v886 = vsel %vm878, %v837, 0
    %v889 = vsel %vm878, %v838, 0
    %891 = vmatprep.subr.bf16.mxu0 0
    %892 = vmatpush1.bf16.msra.mxu0 0
    %893 = vmatprep.subr.bf16.mxu0 0
    %894 = vmatpush1.bf16.msra.mxu0 0
    %895 = vmatprep.subr.bf16.mxu0 0
    %896 = vmatpush1.bf16.msra.mxu0 0
    %897 = vmatprep.subr.bf16.mxu0 0
    %898 = vmatpush1.bf16.msra.mxu0 0
    %899 = vmatprep.subr.bf16.mxu0 0
    %900 = vmatpush1.bf16.msra.mxu0 %v873
    %901 = vmatprep.subr.bf16.mxu0 0
    %902 = vmatpush1.bf16.msra.mxu0 %v872
    %903 = vmatprep.subr.bf16.mxu0 0
    %904 = vmatpush1.bf16.msra.mxu0 %v871
    %905 = vmatprep.subr.bf16.mxu0 0
    %906 = vmatpush1.bf16.msra.mxu0 %v870
    %907 = vmatprep.subr.bf16.mxu0 0
    %908 = vmatpush2.bf16.msra.mxu0 0
    %909 = vmatprep.subr.bf16.mxu0 0
    %910 = vmatpush2.bf16.msra.mxu0 0
    %911 = vmatprep.subr.bf16.mxu0 0
    %912 = vmatpush2.bf16.msra.mxu0 0
    %913 = vmatprep.subr.bf16.mxu0 0
    %914 = vmatpush2.bf16.msra.mxu0 0
    %915 = vmatprep.subr.bf16.mxu0 0
    %916 = vmatpush2.bf16.msra.mxu0 0
    %917 = vmatprep.subr.bf16.mxu0 0
    %918 = vmatpush2.bf16.msra.mxu0 0
    %919 = vmatprep.subr.bf16.mxu0 0
    %920 = vmatpush2.bf16.msra.mxu0 0
    %921 = vmatprep.subr.bf16.mxu0 0
    %922 = vmatpush2.bf16.msra.mxu0 0
    %923 = vmatprep.mubr.bf16.mxu0 0
    %924 = vmatmul.mubr.bf16.gmra.mxu0 %v880
    %v925 = vpop.f32.mrf.mxu0
    %v926 = vadd.f32 %v852, %v925
    %v927 = vpop.f32.mrf.mxu0
    %v928 = vpop.f32.mrf.mxu0
    %v929 = vadd.f32 %v852, %v928
    %v930 = vpop.f32.mrf.mxu0
    %931 = vmatprep.mubr.bf16.mxu0 0
    %932 = vmatmul.mubr.bf16.gmra.mxu0 %v883
    %v933 = vpop.f32.mrf.mxu0
    %v934 = vadd.f32 %v852, %v933
    %v935 = vpop.f32.mrf.mxu0
    %v936 = vpop.f32.mrf.mxu0
    %v937 = vadd.f32 %v852, %v936
    %v938 = vpop.f32.mrf.mxu0
    %939 = vmatprep.mubr.bf16.mxu0 0
    %940 = vmatmul.mubr.bf16.gmra.mxu0 %v886
    %v941 = vpop.f32.mrf.mxu0
    %v942 = vadd.f32 %v852, %v941
    %v943 = vpop.f32.mrf.mxu0
    %v944 = vpop.f32.mrf.mxu0
    %v945 = vadd.f32 %v852, %v944
    %v946 = vpop.f32.mrf.mxu0
    %947 = vmatprep.mubr.bf16.mxu0 0
    %948 = vmatmul.mubr.bf16.gmra.mxu0 %v889
    %v949 = vpop.f32.mrf.mxu0
    %v950 = vadd.f32 %v852, %v949
    %v951 = vpop.f32.mrf.mxu0
    %v952 = vpop.f32.mrf.mxu0
    %v953 = vadd.f32 %v852, %v952
    %v954 = vpop.f32.mrf.mxu0
    %955 = vdwg.mxu0
    %vm956 = vcmp.gt.f32.partialorder %v926, 0.0
    %vm957 = vcmp.gt.f32.partialorder %v929, 0.0
    %vm958 = vcmp.gt.f32.partialorder %v934, 0.0
    %vm959 = vcmp.gt.f32.partialorder %v937, 0.0
    %vm960 = vcmp.gt.f32.partialorder %v942, 0.0
    %vm961 = vcmp.gt.f32.partialorder %v945, 0.0
    %vm962 = vcmp.gt.f32.partialorder %v950, 0.0
    %vm963 = vcmp.gt.f32.partialorder %v953, 0.0
    %v964 = vmul.f32 %v926, 0.01
    %v965 = vmul.f32 %v929, 0.01
    %v966 = vmul.f32 %v934, 0.01
    %v967 = vmul.f32 %v937, 0.01
    %v968 = vmul.f32 %v942, 0.01
    %v969 = vmul.f32 %v945, 0.01
    %v970 = vmul.f32 %v950, 0.01
    %v971 = vmul.f32 %v953, 0.01
    %v972 = vsel %vm956, %v926, %v964
    %v973 = vsel %vm957, %v929, %v965
    %v974 = vsel %vm958, %v934, %v966
    %v975 = vsel %vm959, %v937, %v967
    %v976 = vsel %vm960, %v942, %v968
    %v977 = vsel %vm961, %v945, %v969
    %v978 = vsel %vm962, %v950, %v970
    %v979 = vsel %vm963, %v953, %v971
    %v980 = vmax.f32 %v972, %v973
    %v981 = vmax.f32 %v980, %v974
    %v982 = vmax.f32 %v981, %v975
    %v983 = vmax.f32 %v982, %v976
    %v984 = vmax.f32 %v983, %v977
    %v985 = vmax.f32 %v984, %v978
    %v986 = vmax.f32 %v985, %v979
    %987 = vst [vmem:[#allocation13] sm:$0xff] %v986
    %v988 = vpack.c.bf16 %v986, %v986
    %v989 = vld [vmem:[#allocation10] sm:$0xf]
    %v990 = vld [vmem:[#allocation10 + $0x4] sm:$0xf]
    %v991 = vld [vmem:[#allocation10 + $0x8] sm:$0xf]
    %v992 = vld [vmem:[#allocation10 + $0xc] sm:$0xf]
    %v993 = vld [vmem:[#allocation10 + $0x10] sm:$0xf]
    %v994 = vld [vmem:[#allocation10 + $0x14] sm:$0xf]
    %v995 = vld [vmem:[#allocation10 + $0x18] sm:$0xf]
    %v996 = vld [vmem:[#allocation10 + $0x1c] sm:$0xf]
    %v997 = vld [vmem:[#allocation10 + $0x20] sm:$0xf]
    %v998 = vld [vmem:[#allocation10 + $0x24] sm:$0xf]
    %v999 = vld [vmem:[#allocation10 + $0x28] sm:$0xf]
    %v1000 = vld [vmem:[#allocation10 + $0x2c] sm:$0xf]
    %v1001 = vld [vmem:[#allocation10 + $0x30] sm:$0xf]
    %v1002 = vld [vmem:[#allocation10 + $0x34] sm:$0xf]
    %v1003 = vld [vmem:[#allocation10 + $0x38] sm:$0xf]
    %v1004 = vld [vmem:[#allocation10 + $0x3c] sm:$0xf]
    %v1005 = vld [vmem:[%s13] sm:$0x1]
    %v1007 = vlaneseq
    %v1008 = vshrl.u32 %v1007, 7
    %v1009 = vsub.s32 0, %v1008
    %v1010 = vrot.slane %v1005, %v1009
    %v1028 = vunpack.c.l.b16 %v989
    %v1029 = vunpack.c.l.b16 %v990
    %v1030 = vunpack.c.l.b16 %v991
    %v1031 = vunpack.c.l.b16 %v992
    %v1032 = vunpack.c.l.b16 %v993
    %v1033 = vunpack.c.l.b16 %v994
    %v1034 = vunpack.c.l.b16 %v995
    %v1035 = vunpack.c.l.b16 %v996
    %v1036 = vunpack.c.l.b16 %v997
    %v1037 = vunpack.c.l.b16 %v998
    %v1038 = vunpack.c.l.b16 %v999
    %v1039 = vunpack.c.l.b16 %v1000
    %v1040 = vunpack.c.l.b16 %v1001
    %v1041 = vunpack.c.l.b16 %v1002
    %v1042 = vunpack.c.l.b16 %v1003
    %v1043 = vunpack.c.l.b16 %v1004
    %v1044 = vpack.c.b16 %v1029, %v1028
    %v1045 = vpack.c.b16 %v1031, %v1030
    %v1046 = vpack.c.b16 %v1033, %v1032
    %v1047 = vpack.c.b16 %v1035, %v1034
    %v1048 = vpack.c.b16 %v1037, %v1036
    %v1049 = vpack.c.b16 %v1039, %v1038
    %v1050 = vpack.c.b16 %v1041, %v1040
    %v1051 = vpack.c.b16 %v1043, %v1042
    %1060 = vmatprep.subr.bf16.mxu0 0
    %1061 = vmatpush1.bf16.msra.mxu0 %v1051
    %1062 = vmatprep.subr.bf16.mxu0 0
    %1063 = vmatpush1.bf16.msra.mxu0 %v1050
    %1064 = vmatprep.subr.bf16.mxu0 0
    %1065 = vmatpush1.bf16.msra.mxu0 %v1049
    %1066 = vmatprep.subr.bf16.mxu0 0
    %1067 = vmatpush1.bf16.msra.mxu0 %v1048
    %1068 = vmatprep.subr.bf16.mxu0 0
    %1069 = vmatpush1.bf16.msra.mxu0 %v1047
    %1070 = vmatprep.subr.bf16.mxu0 0
    %1071 = vmatpush1.bf16.msra.mxu0 %v1046
    %1072 = vmatprep.subr.bf16.mxu0 0
    %1073 = vmatpush1.bf16.msra.mxu0 %v1045
    %1074 = vmatprep.subr.bf16.mxu0 0
    %1075 = vmatpush1.bf16.msra.mxu0 %v1044
    %1076 = vmatprep.subr.bf16.mxu0 0
    %1077 = vmatpush2.bf16.msra.mxu0 0
    %1078 = vmatprep.subr.bf16.mxu0 0
    %1079 = vmatpush2.bf16.msra.mxu0 0
    %1080 = vmatprep.subr.bf16.mxu0 0
    %1081 = vmatpush2.bf16.msra.mxu0 0
    %1082 = vmatprep.subr.bf16.mxu0 0
    %1083 = vmatpush2.bf16.msra.mxu0 0
    %1084 = vmatprep.subr.bf16.mxu0 0
    %1085 = vmatpush2.bf16.msra.mxu0 0
    %1086 = vmatprep.subr.bf16.mxu0 0
    %1087 = vmatpush2.bf16.msra.mxu0 0
    %1088 = vmatprep.subr.bf16.mxu0 0
    %1089 = vmatpush2.bf16.msra.mxu0 0
    %1090 = vmatprep.subr.bf16.mxu0 0
    %1091 = vmatpush2.bf16.msra.mxu0 0
    %1092 = vmatprep.mubr.bf16.mxu0 0
    %1093 = vmatmul.mubr.bf16.gmra.mxu0 %v988
    %v1094 = vpop.f32.mrf.mxu0
    %v1095 = vadd.f32 %v1010, %v1094
    %v1096 = vpop.f32.mrf.mxu0
    %v1097 = vpop.f32.mrf.mxu0
    %v1098 = vpop.f32.mrf.mxu0
    %1099 = vdwg.mxu0
    %1100 = vst [vmem:[#allocation16] sm:$0xff] %v1095
    %v1101 = vld [vmem:[#allocation8] sm:$0xf]
    %v1102 = vld [vmem:[#allocation8 + $0x4] sm:$0xf]
    %v1103 = vld [vmem:[#allocation8 + $0x8] sm:$0xf]
    %v1104 = vld [vmem:[#allocation8 + $0xc] sm:$0xf]
    %v1105 = vld [vmem:[#allocation8 + $0x10] sm:$0xf]
    %v1106 = vld [vmem:[#allocation8 + $0x14] sm:$0xf]
    %v1107 = vld [vmem:[#allocation8 + $0x18] sm:$0xf]
    %v1108 = vld [vmem:[#allocation8 + $0x1c] sm:$0xf]
    %v1109 = vld [vmem:[#allocation8 + $0x20] sm:$0xf]
    %v1110 = vld [vmem:[#allocation8 + $0x24] sm:$0xf]
    %v1111 = vld [vmem:[#allocation8 + $0x28] sm:$0xf]
    %v1112 = vld [vmem:[#allocation8 + $0x2c] sm:$0xf]
    %v1113 = vld [vmem:[#allocation8 + $0x30] sm:$0xf]
    %v1114 = vld [vmem:[#allocation8 + $0x34] sm:$0xf]
    %v1115 = vld [vmem:[#allocation8 + $0x38] sm:$0xf]
    %v1116 = vld [vmem:[#allocation8 + $0x3c] sm:$0xf]
    %v1117 = vld [vmem:[%s11] sm:$0x1]
    %v1119 = vlaneseq
    %v1120 = vshrl.u32 %v1119, 7
    %v1121 = vsub.s32 0, %v1120
    %v1122 = vrot.slane %v1117, %v1121
    %v1140 = vunpack.c.l.b16 %v1101
    %v1141 = vunpack.c.l.b16 %v1102
    %v1142 = vunpack.c.l.b16 %v1103
    %v1143 = vunpack.c.l.b16 %v1104
    %v1144 = vunpack.c.l.b16 %v1105
    %v1145 = vunpack.c.l.b16 %v1106
    %v1146 = vunpack.c.l.b16 %v1107
    %v1147 = vunpack.c.l.b16 %v1108
    %v1148 = vunpack.c.l.b16 %v1109
    %v1149 = vunpack.c.l.b16 %v1110
    %v1150 = vunpack.c.l.b16 %v1111
    %v1151 = vunpack.c.l.b16 %v1112
    %v1152 = vunpack.c.l.b16 %v1113
    %v1153 = vunpack.c.l.b16 %v1114
    %v1154 = vunpack.c.l.b16 %v1115
    %v1155 = vunpack.c.l.b16 %v1116
    %v1156 = vpack.c.b16 %v1141, %v1140
    %v1157 = vpack.c.b16 %v1143, %v1142
    %v1158 = vpack.c.b16 %v1145, %v1144
    %v1159 = vpack.c.b16 %v1147, %v1146
    %v1160 = vpack.c.b16 %v1149, %v1148
    %v1161 = vpack.c.b16 %v1151, %v1150
    %v1162 = vpack.c.b16 %v1153, %v1152
    %v1163 = vpack.c.b16 %v1155, %v1154
    %1172 = vmatprep.subr.bf16.mxu0 0
    %1173 = vmatpush1.bf16.msra.mxu0 %v1163
    %1174 = vmatprep.subr.bf16.mxu0 0
    %1175 = vmatpush1.bf16.msra.mxu0 %v1162
    %1176 = vmatprep.subr.bf16.mxu0 0
    %1177 = vmatpush1.bf16.msra.mxu0 %v1161
    %1178 = vmatprep.subr.bf16.mxu0 0
    %1179 = vmatpush1.bf16.msra.mxu0 %v1160
    %1180 = vmatprep.subr.bf16.mxu0 0
    %1181 = vmatpush1.bf16.msra.mxu0 %v1159
    %1182 = vmatprep.subr.bf16.mxu0 0
    %1183 = vmatpush1.bf16.msra.mxu0 %v1158
    %1184 = vmatprep.subr.bf16.mxu0 0
    %1185 = vmatpush1.bf16.msra.mxu0 %v1157
    %1186 = vmatprep.subr.bf16.mxu0 0
    %1187 = vmatpush1.bf16.msra.mxu0 %v1156
    %1188 = vmatprep.subr.bf16.mxu0 0
    %1189 = vmatpush2.bf16.msra.mxu0 0
    %1190 = vmatprep.subr.bf16.mxu0 0
    %1191 = vmatpush2.bf16.msra.mxu0 0
    %1192 = vmatprep.subr.bf16.mxu0 0
    %1193 = vmatpush2.bf16.msra.mxu0 0
    %1194 = vmatprep.subr.bf16.mxu0 0
    %1195 = vmatpush2.bf16.msra.mxu0 0
    %1196 = vmatprep.subr.bf16.mxu0 0
    %1197 = vmatpush2.bf16.msra.mxu0 0
    %1198 = vmatprep.subr.bf16.mxu0 0
    %1199 = vmatpush2.bf16.msra.mxu0 0
    %1200 = vmatprep.subr.bf16.mxu0 0
    %1201 = vmatpush2.bf16.msra.mxu0 0
    %1202 = vmatprep.subr.bf16.mxu0 0
    %1203 = vmatpush2.bf16.msra.mxu0 0
    %1204 = vmatprep.mubr.bf16.mxu0 0
    %1205 = vmatmul.mubr.bf16.gmra.mxu0 %v988
    %v1206 = vpop.f32.mrf.mxu0
    %v1207 = vadd.f32 %v1122, %v1206
    %v1208 = vpop.f32.mrf.mxu0
    %v1209 = vpop.f32.mrf.mxu0
    %v1210 = vpop.f32.mrf.mxu0
    %1211 = vdwg.mxu0
    %vm1212 = vcmp.gt.f32.partialorder %v1207, 0.0
    %v1213 = vmul.f32 %v1207, 0.01
    %v1214 = vsel %vm1212, %v1207, %v1213
    %1215 = vst [vmem:[#allocation14] sm:$0xff] %v1214
    %v1216 = vld [vmem:[#allocation5] sm:$0xff]
    %v1217 = vpack.c.bf16 %v1216, %v1216
    %v1218 = vld [vmem:[%s14] sm:$0xf]
    %v1219 = vld [vmem:[%s14 + $0x4] sm:$0xf]
    %v1220 = vld [vmem:[%s14 + $0x8] sm:$0xf]
    %v1221 = vld [vmem:[%s14 + $0xc] sm:$0xf]
    %v1222 = vld [vmem:[%s14 + $0x10] sm:$0xf]
    %v1223 = vld [vmem:[%s14 + $0x14] sm:$0xf]
    %v1224 = vld [vmem:[%s14 + $0x18] sm:$0xf]
    %v1225 = vld [vmem:[%s14 + $0x1c] sm:$0xf]
    %v1226 = vld [vmem:[%s14 + $0x20] sm:$0xf]
    %v1227 = vld [vmem:[%s14 + $0x24] sm:$0xf]
    %v1228 = vld [vmem:[%s14 + $0x28] sm:$0xf]
    %v1229 = vld [vmem:[%s14 + $0x2c] sm:$0xf]
    %v1230 = vld [vmem:[%s14 + $0x30] sm:$0xf]
    %v1231 = vld [vmem:[%s14 + $0x34] sm:$0xf]
    %v1232 = vld [vmem:[%s14 + $0x38] sm:$0xf]
    %v1233 = vld [vmem:[%s14 + $0x3c] sm:$0xf]
    %v1234 = vpack.c.bf16 %v1214, %v1214
    %v1235 = vld [vmem:[%s15] sm:$0xf]
    %v1236 = vld [vmem:[%s15 + $0x4] sm:$0xf]
    %v1237 = vld [vmem:[%s15 + $0x8] sm:$0xf]
    %v1238 = vld [vmem:[%s15 + $0xc] sm:$0xf]
    %v1239 = vld [vmem:[%s15 + $0x10] sm:$0xf]
    %v1240 = vld [vmem:[%s15 + $0x14] sm:$0xf]
    %v1241 = vld [vmem:[%s15 + $0x18] sm:$0xf]
    %v1242 = vld [vmem:[%s15 + $0x1c] sm:$0xf]
    %v1243 = vld [vmem:[%s15 + $0x20] sm:$0xf]
    %v1244 = vld [vmem:[%s15 + $0x24] sm:$0xf]
    %v1245 = vld [vmem:[%s15 + $0x28] sm:$0xf]
    %v1246 = vld [vmem:[%s15 + $0x2c] sm:$0xf]
    %v1247 = vld [vmem:[%s15 + $0x30] sm:$0xf]
    %v1248 = vld [vmem:[%s15 + $0x34] sm:$0xf]
    %v1249 = vld [vmem:[%s15 + $0x38] sm:$0xf]
    %v1250 = vld [vmem:[%s15 + $0x3c] sm:$0xf]
    %v1267 = vunpack.c.l.b16 %v1235
    %v1268 = vunpack.c.l.b16 %v1236
    %v1269 = vunpack.c.l.b16 %v1237
    %v1270 = vunpack.c.l.b16 %v1238
    %v1271 = vunpack.c.l.b16 %v1239
    %v1272 = vunpack.c.l.b16 %v1240
    %v1273 = vunpack.c.l.b16 %v1241
    %v1274 = vunpack.c.l.b16 %v1242
    %v1275 = vunpack.c.l.b16 %v1243
    %v1276 = vunpack.c.l.b16 %v1244
    %v1277 = vunpack.c.l.b16 %v1245
    %v1278 = vunpack.c.l.b16 %v1246
    %v1279 = vunpack.c.l.b16 %v1247
    %v1280 = vunpack.c.l.b16 %v1248
    %v1281 = vunpack.c.l.b16 %v1249
    %v1282 = vunpack.c.l.b16 %v1250
    %v1283 = vpack.c.b16 %v1268, %v1267
    %v1284 = vpack.c.b16 %v1270, %v1269
    %v1285 = vpack.c.b16 %v1272, %v1271
    %v1286 = vpack.c.b16 %v1274, %v1273
    %v1287 = vpack.c.b16 %v1276, %v1275
    %v1288 = vpack.c.b16 %v1278, %v1277
    %v1289 = vpack.c.b16 %v1280, %v1279
    %v1290 = vpack.c.b16 %v1282, %v1281
    %1299 = vmatprep.subr.bf16.mxu0 0
    %1300 = vmatpush1.bf16.msra.mxu0 %v1290
    %1301 = vmatprep.subr.bf16.mxu0 0
    %1302 = vmatpush1.bf16.msra.mxu0 %v1289
    %1303 = vmatprep.subr.bf16.mxu0 0
    %1304 = vmatpush1.bf16.msra.mxu0 %v1288
    %1305 = vmatprep.subr.bf16.mxu0 0
    %1306 = vmatpush1.bf16.msra.mxu0 %v1287
    %1307 = vmatprep.subr.bf16.mxu0 0
    %1308 = vmatpush1.bf16.msra.mxu0 %v1286
    %1309 = vmatprep.subr.bf16.mxu0 0
    %1310 = vmatpush1.bf16.msra.mxu0 %v1285
    %1311 = vmatprep.subr.bf16.mxu0 0
    %1312 = vmatpush1.bf16.msra.mxu0 %v1284
    %1313 = vmatprep.subr.bf16.mxu0 0
    %1314 = vmatpush1.bf16.msra.mxu0 %v1283
    %1315 = vmatprep.subr.bf16.mxu0 0
    %1316 = vmatpush2.bf16.msra.mxu0 0
    %1317 = vmatprep.subr.bf16.mxu0 0
    %1318 = vmatpush2.bf16.msra.mxu0 0
    %1319 = vmatprep.subr.bf16.mxu0 0
    %1320 = vmatpush2.bf16.msra.mxu0 0
    %1321 = vmatprep.subr.bf16.mxu0 0
    %1322 = vmatpush2.bf16.msra.mxu0 0
    %1323 = vmatprep.subr.bf16.mxu0 0
    %1324 = vmatpush2.bf16.msra.mxu0 0
    %1325 = vmatprep.subr.bf16.mxu0 0
    %1326 = vmatpush2.bf16.msra.mxu0 0
    %1327 = vmatprep.subr.bf16.mxu0 0
    %1328 = vmatpush2.bf16.msra.mxu0 0
    %1329 = vmatprep.subr.bf16.mxu0 0
    %1330 = vmatpush2.bf16.msra.mxu0 0
    %1331 = vmatprep.mubr.bf16.mxu0 0
    %1332 = vmatmul.mubr.bf16.gmra.mxu0 %v1234
    %v1333 = vpop.f32.mrf.mxu0
    %v1334 = vadd.f32 0.0, %v1333
    %v1335 = vpop.f32.mrf.mxu0
    %v1336 = vpop.f32.mrf.mxu0
    %v1337 = vpop.f32.mrf.mxu0
    %1338 = vdwg.mxu0
    %v1355 = vunpack.c.l.b16 %v1218
    %v1356 = vunpack.c.l.b16 %v1219
    %v1357 = vunpack.c.l.b16 %v1220
    %v1358 = vunpack.c.l.b16 %v1221
    %v1359 = vunpack.c.l.b16 %v1222
    %v1360 = vunpack.c.l.b16 %v1223
    %v1361 = vunpack.c.l.b16 %v1224
    %v1362 = vunpack.c.l.b16 %v1225
    %v1363 = vunpack.c.l.b16 %v1226
    %v1364 = vunpack.c.l.b16 %v1227
    %v1365 = vunpack.c.l.b16 %v1228
    %v1366 = vunpack.c.l.b16 %v1229
    %v1367 = vunpack.c.l.b16 %v1230
    %v1368 = vunpack.c.l.b16 %v1231
    %v1369 = vunpack.c.l.b16 %v1232
    %v1370 = vunpack.c.l.b16 %v1233
    %v1371 = vpack.c.b16 %v1356, %v1355
    %v1372 = vpack.c.b16 %v1358, %v1357
    %v1373 = vpack.c.b16 %v1360, %v1359
    %v1374 = vpack.c.b16 %v1362, %v1361
    %v1375 = vpack.c.b16 %v1364, %v1363
    %v1376 = vpack.c.b16 %v1366, %v1365
    %v1377 = vpack.c.b16 %v1368, %v1367
    %v1378 = vpack.c.b16 %v1370, %v1369
    %1387 = vmatprep.subr.bf16.mxu0 0
    %1388 = vmatpush1.bf16.msra.mxu0 %v1378
    %1389 = vmatprep.subr.bf16.mxu0 0
    %1390 = vmatpush1.bf16.msra.mxu0 %v1377
    %1391 = vmatprep.subr.bf16.mxu0 0
    %1392 = vmatpush1.bf16.msra.mxu0 %v1376
    %1393 = vmatprep.subr.bf16.mxu0 0
    %1394 = vmatpush1.bf16.msra.mxu0 %v1375
    %1395 = vmatprep.subr.bf16.mxu0 0
    %1396 = vmatpush1.bf16.msra.mxu0 %v1374
    %1397 = vmatprep.subr.bf16.mxu0 0
    %1398 = vmatpush1.bf16.msra.mxu0 %v1373
    %1399 = vmatprep.subr.bf16.mxu0 0
    %1400 = vmatpush1.bf16.msra.mxu0 %v1372
    %1401 = vmatprep.subr.bf16.mxu0 0
    %1402 = vmatpush1.bf16.msra.mxu0 %v1371
    %1403 = vmatprep.subr.bf16.mxu0 0
    %1404 = vmatpush2.bf16.msra.mxu0 0
    %1405 = vmatprep.subr.bf16.mxu0 0
    %1406 = vmatpush2.bf16.msra.mxu0 0
    %1407 = vmatprep.subr.bf16.mxu0 0
    %1408 = vmatpush2.bf16.msra.mxu0 0
    %1409 = vmatprep.subr.bf16.mxu0 0
    %1410 = vmatpush2.bf16.msra.mxu0 0
    %1411 = vmatprep.subr.bf16.mxu0 0
    %1412 = vmatpush2.bf16.msra.mxu0 0
    %1413 = vmatprep.subr.bf16.mxu0 0
    %1414 = vmatpush2.bf16.msra.mxu0 0
    %1415 = vmatprep.subr.bf16.mxu0 0
    %1416 = vmatpush2.bf16.msra.mxu0 0
    %1417 = vmatprep.subr.bf16.mxu0 0
    %1418 = vmatpush2.bf16.msra.mxu0 0
    %1419 = vmatprep.mubr.bf16.mxu0 0
    %1420 = vmatmul.mubr.bf16.gmra.mxu0 %v1217
    %v1421 = vpop.f32.mrf.mxu0
    %v1422 = vadd.f32 %v1334, %v1421
    %v1423 = vpop.f32.mrf.mxu0
    %v1424 = vpop.f32.mrf.mxu0
    %v1425 = vpop.f32.mrf.mxu0
    %1426 = vdwg.mxu0
    %v1427 = vld [vmem:[%s16] sm:$0x1]
    %v1429 = vlaneseq
    %v1430 = vshrl.u32 %v1429, 7
    %v1431 = vsub.s32 0, %v1430
    %v1432 = vrot.slane %v1427, %v1431
    %v1434 = vadd.f32 %v1422, %v1432
    %vm1435 = vcmp.gt.f32.partialorder %v1434, 0.0
    %v1436 = vmul.f32 %v1434, 0.01
    %v1437 = vsel %vm1435, %v1434, %v1436
    %v1438 = vpack.c.bf16 %v1437, %v1437
    %v1439 = vld [vmem:[#allocation11] sm:$0xf]
    %v1440 = vld [vmem:[#allocation11 + $0x4] sm:$0xf]
    %v1441 = vld [vmem:[#allocation11 + $0x8] sm:$0xf]
    %v1442 = vld [vmem:[#allocation11 + $0xc] sm:$0xf]
    %v1443 = vld [vmem:[#allocation11 + $0x10] sm:$0xf]
    %v1444 = vld [vmem:[#allocation11 + $0x14] sm:$0xf]
    %v1445 = vld [vmem:[#allocation11 + $0x18] sm:$0xf]
    %v1446 = vld [vmem:[#allocation11 + $0x1c] sm:$0xf]
    %v1447 = vld [vmem:[%s18] sm:$0x1]
    %v1449 = vlaneseq
    %v1450 = vshrl.u32 %v1449, 7
    %v1451 = vsub.s32 0, %v1450
    %v1452 = vrot.slane %v1447, %v1451
    %v1462 = vunpack.c.l.b16 %v1439
    %v1463 = vunpack.c.l.b16 %v1440
    %v1464 = vunpack.c.l.b16 %v1441
    %v1465 = vunpack.c.l.b16 %v1442
    %v1466 = vunpack.c.l.b16 %v1443
    %v1467 = vunpack.c.l.b16 %v1444
    %v1468 = vunpack.c.l.b16 %v1445
    %v1469 = vunpack.c.l.b16 %v1446
    %v1470 = vpack.c.b16 %v1463, %v1462
    %v1471 = vpack.c.b16 %v1465, %v1464
    %v1472 = vpack.c.b16 %v1467, %v1466
    %v1473 = vpack.c.b16 %v1469, %v1468
    %v1479 = vsel %vm878, %v1438, 0
    %1481 = vmatprep.subr.bf16.mxu0 0
    %1482 = vmatpush1.bf16.msra.mxu0 0
    %1483 = vmatprep.subr.bf16.mxu0 0
    %1484 = vmatpush1.bf16.msra.mxu0 0
    %1485 = vmatprep.subr.bf16.mxu0 0
    %1486 = vmatpush1.bf16.msra.mxu0 0
    %1487 = vmatprep.subr.bf16.mxu0 0
    %1488 = vmatpush1.bf16.msra.mxu0 0
    %1489 = vmatprep.subr.bf16.mxu0 0
    %1490 = vmatpush1.bf16.msra.mxu0 %v1473
    %1491 = vmatprep.subr.bf16.mxu0 0
    %1492 = vmatpush1.bf16.msra.mxu0 %v1472
    %1493 = vmatprep.subr.bf16.mxu0 0
    %1494 = vmatpush1.bf16.msra.mxu0 %v1471
    %1495 = vmatprep.subr.bf16.mxu0 0
    %1496 = vmatpush1.bf16.msra.mxu0 %v1470
    %1497 = vmatprep.subr.bf16.mxu0 0
    %1498 = vmatpush2.bf16.msra.mxu0 0
    %1499 = vmatprep.subr.bf16.mxu0 0
    %1500 = vmatpush2.bf16.msra.mxu0 0
    %1501 = vmatprep.subr.bf16.mxu0 0
    %1502 = vmatpush2.bf16.msra.mxu0 0
    %1503 = vmatprep.subr.bf16.mxu0 0
    %1504 = vmatpush2.bf16.msra.mxu0 0
    %1505 = vmatprep.subr.bf16.mxu0 0
    %1506 = vmatpush2.bf16.msra.mxu0 0
    %1507 = vmatprep.subr.bf16.mxu0 0
    %1508 = vmatpush2.bf16.msra.mxu0 0
    %1509 = vmatprep.subr.bf16.mxu0 0
    %1510 = vmatpush2.bf16.msra.mxu0 0
    %1511 = vmatprep.subr.bf16.mxu0 0
    %1512 = vmatpush2.bf16.msra.mxu0 0
    %1513 = vmatprep.mubr.bf16.mxu0 0
    %1514 = vmatmul.mubr.bf16.gmra.mxu0 %v1479
    %v1515 = vpop.f32.mrf.mxu0
    %v1516 = vadd.f32 %v1452, %v1515
    %v1517 = vpop.f32.mrf.mxu0
    %v1518 = vpop.f32.mrf.mxu0
    %v1519 = vpop.f32.mrf.mxu0
    %1520 = vdwg.mxu0
    %1521 = vst [vmem:[#allocation17] sm:$0xff] %v1516
    // Predicated region
    $region102: #{tpu_custom_call.1} parent=1 // pred_check
      _
    $region103: #{tpu_custom_call.1} parent=1 // pred_check_branch
      %1523 = sbr.rel (0) target = $region105
    $region104: #{tpu_custom_call.1} parent=1 // pred_region
      %s1525 = ssub.s32 128, 128
      %1526 = vsyncadd [#allocation4], %s1525
      %s1528 = sshll.u32 [#allocation13], 4
      %s1529 = int_to_ptr.vmem [resolvable:$true] %s1528
      %1531 = dma.vmem_to_hbm [thread:$0]  %s1529, 128, %s19, [#allocation4]
    $region105: #{tpu_custom_call.1} parent=1 // pred_fallthru
      _
    // Predicated region
    $region106: #{tpu_custom_call.1} parent=1 // pred_check
      _
    $region107: #{tpu_custom_call.1} parent=1 // pred_check_branch
      %1533 = sbr.rel (0) target = $region109
    $region108: #{tpu_custom_call.1} parent=1 // pred_region
      %s1535 = ssub.s32 128, 128
      %1536 = vsyncadd [#allocation15], %s1535
      %s1538 = sshll.u32 [#allocation14], 4
      %s1539 = int_to_ptr.vmem [resolvable:$true] %s1538
      %1541 = dma.vmem_to_hbm [thread:$0]  %s1539, 128, %s20, [#allocation15]
    $region109: #{tpu_custom_call.1} parent=1 // pred_fallthru
      _
    // Predicated region
    $region110: #{tpu_custom_call.1} parent=1 // pred_check
      _
    $region111: #{tpu_custom_call.1} parent=1 // pred_check_branch
      %1543 = sbr.rel (0) target = $region113
    $region112: #{tpu_custom_call.1} parent=1 // pred_region
      %s1545 = ssub.s32 128, 128
      %1546 = vsyncadd [#allocation15], %s1545
      %s1548 = sshll.u32 [#allocation16], 4
      %s1549 = int_to_ptr.vmem [resolvable:$true] %s1548
      %1551 = dma.vmem_to_hbm [thread:$0]  %s1549, 128, %s21, [#allocation15]
    $region113: #{tpu_custom_call.1} parent=1 // pred_fallthru
      _
    // Predicated region
    $region114: #{tpu_custom_call.1} parent=1 // pred_check
      _
    $region115: #{tpu_custom_call.1} parent=1 // pred_check_branch
      %1553 = sbr.rel (0) target = $region117
    $region116: #{tpu_custom_call.1} parent=1 // pred_region
      %s1555 = ssub.s32 128, 128
      %1556 = vsyncadd [#allocation18], %s1555
      %s1558 = sshll.u32 [#allocation17], 4
      %s1559 = int_to_ptr.vmem [resolvable:$true] %s1558
      %1561 = dma.vmem_to_hbm [thread:$0]  %s1559, 128, %s22, [#allocation18]
    $region117: #{tpu_custom_call.1} parent=1 // pred_fallthru
      _
    // Predicated region
    $region118: #{tpu_custom_call.1} parent=1 // pred_check
      _
    $region119: #{tpu_custom_call.1} parent=1 // pred_check_branch
      %1563 = sbr.rel (0) target = $region121
    $region120: #{tpu_custom_call.1} parent=1 // pred_region
      %1564 = dma.done [#allocation4], 128
    $region121: #{tpu_custom_call.1} parent=1 // pred_fallthru
      _
    // Predicated region
    $region122: #{tpu_custom_call.1} parent=1 // pred_check
      _
    $region123: #{tpu_custom_call.1} parent=1 // pred_check_branch
      %1566 = sbr.rel (0) target = $region125
    $region124: #{tpu_custom_call.1} parent=1 // pred_region
      %1567 = dma.done [#allocation15], 128
    $region125: #{tpu_custom_call.1} parent=1 // pred_fallthru
      _
    // Predicated region
    $region126: #{tpu_custom_call.1} parent=1 // pred_check
      _
    $region127: #{tpu_custom_call.1} parent=1 // pred_check_branch
      %1569 = sbr.rel (0) target = $region129
    $region128: #{tpu_custom_call.1} parent=1 // pred_region
      %1570 = dma.done [#allocation15], 128
    $region129: #{tpu_custom_call.1} parent=1 // pred_fallthru
      _
    // Predicated region
    $region130: #{tpu_custom_call.1} parent=1 // pred_check
      _
    $region131: #{tpu_custom_call.1} parent=1 // pred_check_branch
      %1572 = sbr.rel (0) target = $region133
    $region132: #{tpu_custom_call.1} parent=1 // pred_region
      %1573 = dma.done [#allocation18], 128
    $region133: #{tpu_custom_call.1} parent=1 // pred_fallthru
      _
    %1574 = vsyncpa [#allocation3], 1
    %1575 = vsyncpa [#allocation6], 1
    %1576 = vsyncpa [#allocation9], 1
    %1577 = vsyncpa [#allocation12], 1
    %1578 = vsyncpa [#allocation4], 1
    %1579 = vsyncpa [#allocation15], 1
    %1580 = vsyncpa [#allocation18], 1

</llo_original>
